<compile_context>
chip_gen: v5e
topology: v5e:2x2
jax: 0.10.0
libtpu: 0.0.40
codegen_flags: <defaults>
</compile_context>

<pallas_src>
import functools

import jax
import jax.numpy as jnp
from jax.experimental import pallas as pl
from jax.experimental.pallas import tpu as pltpu


LANE_PAD = 128   # each q/k/v projection gets its own 128-lane group


# ---------------------------------------------------------------------------
# Local attention mask (replicates the PyTorch padded-window construction).
# Returns the additive 0/-inf f32 mask used by the reference path.
# ---------------------------------------------------------------------------
def build_local_mask(DHW, local_k):
    D, H, W = DHW
    dk, hk, wk = local_k
    N = D * H * W
    dd, hh, ww = jnp.meshgrid(jnp.arange(D), jnp.arange(H), jnp.arange(W),
                              indexing="ij")
    dq = dd.reshape(N)
    hq = hh.reshape(N)
    wq = ww.reshape(N)
    # key (d', h', w') is inside query (d, h, w)'s window iff
    # 0 <= d' - d + dk//2 < dk   (and similarly for h, w)
    od = dq[None, :] - dq[:, None] + dk // 2
    oh = hq[None, :] - hq[:, None] + hk // 2
    ow = wq[None, :] - wq[:, None] + wk // 2
    local = ((od >= 0) & (od < dk) &
             (oh >= 0) & (oh < hk) &
             (ow >= 0) & (ow < wk))
    return jnp.where(local, 0.0, -jnp.inf).astype(jnp.float32)


# ---------------------------------------------------------------------------
# block_b policy: grid=1 on single-TC chips (v5e / v6e); grid=2 on dual-TC v7x
# so both TensorCores are busy under dimension_semantics=("parallel",).
# ---------------------------------------------------------------------------
def _pick_block_b(B):
    try:
        kind = jax.devices()[0].device_kind.lower()
    except Exception:
        kind = ""
    dual_tc = ("v7" in kind) or ("7x" in kind)
    if dual_tc and B % 2 == 0:
        return B // 2
    return B


# ---------------------------------------------------------------------------
# One-time parameter preparation (run at init, NOT per call).
# ---------------------------------------------------------------------------
def prepare_local_self_attention(params, mask_add, *, scale, block_b,
                                 lp=LANE_PAD):
    f32 = jnp.float32
    C, L = params["w_down"].shape
    assert L <= lp

    gamma = params["gamma"].astype(f32)            # (1, C)
    beta = params["beta"].astype(f32)              # (1, C)
    w_down = params["w_down"].astype(f32)          # (C, L)
    b_down = params["b_down"].astype(f32)          # (1, L)

    # Fold LayerNorm affine into proj_down:
    #   (xn*gamma + beta) @ Wd + bd = xn @ (gamma[:,None]*Wd) + (beta@Wd + bd)
    a_w = w_down * gamma[0][:, None]               # (C, L)
    a_b = beta @ w_down + b_down                   # (1, L)

    def fold(w, s):
        wf = (a_w @ w) * s                         # (C, L)
        bf = (a_b @ w) * s                         # (1, L)
        return (jnp.pad(wf, ((0, 0), (0, lp - L))),
                jnp.pad(bf, ((0, 0), (0, lp - L))))

    wq, bq = fold(params["w_q"].astype(f32), scale)    # 1/sqrt(dim) folded into q
    wk, bk = fold(params["w_k"].astype(f32), 1.0)
    wv, bv = fold(params["w_v"].astype(f32), 1.0)

    w_qkv = jnp.concatenate([wq, wk, wv], axis=1).astype(jnp.bfloat16)  # (C, 3*lp)
    b_qkv = jnp.concatenate([bq, bk, bv], axis=1)                       # (1, 3*lp) f32
    w_up = jnp.pad(params["w_up"].astype(f32),
                   ((0, lp - L), (0, 0))).astype(jnp.bfloat16)          # (lp, C)
    b_up = params["b_up"].astype(f32)                                   # (1, C)

    # Block-diagonal additive mask over the flat (block_b*N) token axis:
    # -1e30 both off-window and off-batch -> exact zeros after softmax.
    N = mask_add.shape[0]
    rows = block_b * N
    neg = jnp.float32(-1e30)
    blk = jnp.where(mask_add == 0.0, 0.0, neg).astype(f32)   # (N, N)
    batch_of = jnp.arange(rows) // N
    same = batch_of[:, None] == batch_of[None, :]
    mask_bd = jnp.where(same, jnp.tile(blk, (block_b, block_b)), neg)   # (rows, rows)

    return dict(w_qkv=w_qkv, b_qkv=b_qkv, w_up=w_up, b_up=b_up,
                mask_bd=mask_bd, block_b=block_b, lp=lp, n_tok=N, dim=C)


# ---------------------------------------------------------------------------
# Pallas kernel: one (block_b*N, C) row slab per grid step, flat attention.
# ---------------------------------------------------------------------------
def _lsa_kernel(x_ref, wqkv_ref, bqkv_ref, wup_ref, bup_ref, mask_ref, o_ref,
                *, lp, eps):
    # ----- LayerNorm normalization only (affine folded into wqkv) ----------
    x = x_ref[...].astype(jnp.float32)                        # (rows, C)
    mean = jnp.mean(x, axis=-1, keepdims=True)
    var = jnp.mean(jnp.square(x - mean), axis=-1, keepdims=True)
    xn = (x - mean) * jax.lax.rsqrt(var + eps)                # (rows, C)

    # ----- fused LN-affine + proj_down + qkv (+ scale): one MXU matmul -----
    qkv = jnp.dot(xn.astype(jnp.bfloat16), wqkv_ref[...],
                  preferred_element_type=jnp.float32) + bqkv_ref[...]
    # 128-lane-aligned slices: no cross-lane relayout
    q = qkv[:, :lp]                                           # scale pre-folded
    k = qkv[:, lp:2 * lp]
    v = qkv[:, 2 * lp:]

    # ----- flat scores + block-diagonal local-window mask -------------------
    scores = jax.lax.dot_general(
        q.astype(jnp.bfloat16), k.astype(jnp.bfloat16),
        dimension_numbers=(((1,), (1,)), ((), ())),
        preferred_element_type=jnp.float32)                   # (rows, rows)
    scores = scores + mask_ref[...]

    # ----- softmax with deferred normalization ------------------------------
    m = jnp.max(scores, axis=-1, keepdims=True)
    p = jnp.exp(scores - m)                                   # off-block -> exact 0
    s = jnp.sum(p, axis=-1, keepdims=True)                    # (rows, 1)

    ctx = jnp.dot(p.astype(jnp.bfloat16), v.astype(jnp.bfloat16),
                  preferred_element_type=jnp.float32)         # (rows, lp)
    ctx = ctx * pl.reciprocal(s, approx=True)                 # EUP slot

    # ----- proj_up: lp -> C --------------------------------------------------
    out = jnp.dot(ctx.astype(jnp.bfloat16), wup_ref[...],
                  preferred_element_type=jnp.float32) + bup_ref[...]
    o_ref[...] = out.astype(o_ref.dtype)


# ---------------------------------------------------------------------------
# Wrapper: BlockSpecs + pallas_call.  Takes the pre-prepared parameter pytree.
# ---------------------------------------------------------------------------
def local_self_attention(x, prepared, *, eps=1e-5):
    B, N, C = x.shape
    assert N == prepared["n_tok"] and C == prepared["dim"]
    block_b = prepared["block_b"]
    lp = prepared["lp"]
    assert B % block_b == 0, "batch must be divisible by block_b"
    rows = block_b * N
    steps = B // block_b

    x2d = x.reshape(B * N, C)                     # free wrapper reshape
    kernel = functools.partial(_lsa_kernel, lp=lp, eps=eps)

    def fixed(shape):
        # NOTE: grid-invariant operands; pl.Buffered(1) would halve their VMEM
        # footprint, but at these sizes (<1 MiB total) it is not worth the
        # lowering risk — revisit if block_b / N grow.
        return pl.BlockSpec(shape, lambda b: (0, 0))

    flops = int(2 * B * N * C * 3 * lp            # fused qkv matmul
                + 4 * steps * rows * rows * lp    # scores + ctx
                + 2 * B * N * lp * C)             # proj_up
    transcendentals = int(steps * rows * rows + 2 * B * N)
    bytes_accessed = int(
        2 * B * N * C * x.dtype.itemsize
        + sum(int(prepared[k].size) * prepared[k].dtype.itemsize
              for k in ("w_qkv", "b_qkv", "w_up", "b_up", "mask_bd")))

    out2d = pl.pallas_call(
        kernel,
        out_shape=jax.ShapeDtypeStruct((B * N, C), x.dtype),
        grid_spec=pltpu.PrefetchScalarGridSpec(
            num_scalar_prefetch=0,
            grid=(steps,),
            in_specs=[
                pl.BlockSpec((rows, C), lambda b: (b, 0)),   # x slab
                fixed((C, 3 * lp)),                          # fused W'
                fixed((1, 3 * lp)),                          # fused b'
                fixed((lp, C)),                              # w_up
                fixed((1, C)),                               # b_up
                fixed((rows, rows)),                         # block-diag mask
            ],
            out_specs=pl.BlockSpec((rows, C), lambda b: (b, 0)),
        ),
        compiler_params=pltpu.CompilerParams(
            dimension_semantics=("parallel",)),
        cost_estimate=pl.CostEstimate(flops=flops,
                                      transcendentals=transcendentals,
                                      bytes_accessed=bytes_accessed),
    )(x2d, prepared["w_qkv"], prepared["b_qkv"],
      prepared["w_up"], prepared["b_up"], prepared["mask_bd"])

    return out2d.reshape(B, N, C)


# ---------------------------------------------------------------------------
# Pure-JAX reference (unfused f32 path, matches the PyTorch module).
# ---------------------------------------------------------------------------
def reference(x, params, mask_add, scale, eps=1e-5):
    mean = x.mean(-1, keepdims=True)
    var = ((x - mean) ** 2).mean(-1, keepdims=True)
    xn = (x - mean) / jnp.sqrt(var + eps)
    xn = xn * params["gamma"][0] + params["beta"][0]
    xl = xn @ params["w_down"] + params["b_down"][0]
    q = xl @ params["w_q"]
    k = xl @ params["w_k"]
    v = xl @ params["w_v"]
    attn = jnp.einsum("bnd,bmd->bnm", q, k) * scale + mask_add[None]
    attn = jax.nn.softmax(attn, axis=-1)
    out = attn @ v
    return out @ params["w_up"] + params["b_up"][0]


if __name__ == "__main__":
    # Small, module-consistent shapes.
    B = 8
    dim = 32                       # C
    local_dim = 20                 # latent dim (padded to 128-lane groups)
    DHW = (2, 4, 4)                # N = 32
    local_k = (3, 6, 6)            # module default
    D, H, W = DHW
    N = D * H * W
    scale = dim ** (-0.5)          # matches PyTorch: scale uses dim, not latent

    key = jax.random.PRNGKey(0)
    ks = jax.random.split(key, 8)

    params = {
        "gamma":  jnp.ones((1, dim), jnp.float32),
        "beta":   jnp.zeros((1, dim), jnp.float32),
        "w_down": 0.05 * jax.random.normal(ks[0], (dim, local_dim), jnp.float32),
        "b_down": 0.05 * jax.random.normal(ks[1], (1, local_dim), jnp.float32),
        "w_q":    0.05 * jax.random.normal(ks[2], (local_dim, local_dim), jnp.float32),
        "w_k":    0.05 * jax.random.normal(ks[3], (local_dim, local_dim), jnp.float32),
        "w_v":    0.05 * jax.random.normal(ks[4], (local_dim, local_dim), jnp.float32),
        "w_up":   0.05 * jax.random.normal(ks[5], (local_dim, dim), jnp.float32),
        "b_up":   0.05 * jax.random.normal(ks[6], (1, dim), jnp.float32),
    }

    mask_add = build_local_mask(DHW, local_k)              # (N, N), 0 / -inf
    x = jax.random.normal(ks[7], (B, N, dim), jnp.float32)

    # One-time prep (fold + pad + cast + block-diagonal mask) — not per call.
    block_b = _pick_block_b(B)
    prepared = prepare_local_self_attention(params, mask_add,
                                            scale=scale, block_b=block_b)

    out = local_self_attention(x, prepared)
    out = jax.block_until_ready(out)

    ref = reference(x, params, mask_add, scale)
    assert out.shape == (B, N, dim)
    # bf16 matmul operands + approx reciprocal -> slightly loosened tolerance.
    assert jnp.allclose(out, ref, atol=5e-3, rtol=5e-3), "mismatch vs reference"

    print("KERNEL_OK")
</pallas_src>

<mosaic_0001>
module attributes {stable_mosaic.version = 11 : i64} {
  func.func @_lsa_kernel(%arg0: i32, %arg1: memref<256x32xf32, #tpu.memory_space<vmem>>, %arg2: memref<32x384xbf16, #tpu.memory_space<vmem>>, %arg3: memref<1x384xf32, #tpu.memory_space<vmem>>, %arg4: memref<128x32xbf16, #tpu.memory_space<vmem>>, %arg5: memref<1x32xf32, #tpu.memory_space<vmem>>, %arg6: memref<256x256xf32, #tpu.memory_space<vmem>>, %arg7: memref<256x32xf32, #tpu.memory_space<vmem>>) attributes {dimension_semantics = [#tpu.dimension_semantics<parallel>], iteration_bounds = array<i64: 1>, scalar_prefetch = 0 : i64, scratch_operands = 0 : i64, tpu.core_type = #tpu.core_type<tc>, window_params = [{transform_indices = @transform_0, window_bounds = array<i64: 256, 32>}, {pipeline_mode = #tpu.pipeline_mode<synchronous>, transform_indices = @transform_1, window_bounds = array<i64: 32, 384>}, {pipeline_mode = #tpu.pipeline_mode<synchronous>, transform_indices = @transform_2, window_bounds = array<i64: 1, 384>}, {pipeline_mode = #tpu.pipeline_mode<synchronous>, transform_indices = @transform_3, window_bounds = array<i64: 128, 32>}, {pipeline_mode = #tpu.pipeline_mode<synchronous>, transform_indices = @transform_4, window_bounds = array<i64: 1, 32>}, {pipeline_mode = #tpu.pipeline_mode<synchronous>, transform_indices = @transform_5, window_bounds = array<i64: 256, 256>}, {transform_indices = @transform_6, window_bounds = array<i64: 256, 32>}]} {
    %c0 = arith.constant 0 : index
    %c0_0 = arith.constant 0 : index
    %0 = vector.load %arg1[%c0, %c0_0] : memref<256x32xf32, #tpu.memory_space<vmem>>, vector<256x32xf32>
    %cst = arith.constant dense<0.000000e+00> : vector<256xf32>
    %1 = vector.multi_reduction <add>, %0, %cst [1] : vector<256x32xf32> to vector<256xf32>
    %2 = vector.shape_cast %1 : vector<256xf32> to vector<256x1xf32>
    %cst_1 = arith.constant 3.200000e+01 : f32
    %3 = vector.broadcast %cst_1 : f32 to vector<256x1xf32>
    %4 = arith.divf %2, %3 : vector<256x1xf32>
    %5 = vector.broadcast %4 : vector<256x1xf32> to vector<256x32xf32>
    %6 = arith.subf %0, %5 : vector<256x32xf32>
    %7 = arith.mulf %6, %6 : vector<256x32xf32>
    %cst_2 = arith.constant dense<0.000000e+00> : vector<256xf32>
    %8 = vector.multi_reduction <add>, %7, %cst_2 [1] : vector<256x32xf32> to vector<256xf32>
    %9 = vector.shape_cast %8 : vector<256xf32> to vector<256x1xf32>
    %cst_3 = arith.constant 3.200000e+01 : f32
    %10 = vector.broadcast %cst_3 : f32 to vector<256x1xf32>
    %11 = arith.divf %9, %10 : vector<256x1xf32>
    %12 = vector.broadcast %4 : vector<256x1xf32> to vector<256x32xf32>
    %13 = arith.subf %0, %12 : vector<256x32xf32>
    %cst_4 = arith.constant 9.99999974E-6 : f32
    %14 = vector.broadcast %cst_4 : f32 to vector<256x1xf32>
    %15 = arith.addf %11, %14 : vector<256x1xf32>
    %16 = math.rsqrt %15 : vector<256x1xf32>
    %17 = vector.broadcast %16 : vector<256x1xf32> to vector<256x32xf32>
    %18 = arith.mulf %13, %17 : vector<256x32xf32>
    %19 = arith.truncf %18 : vector<256x32xf32> to vector<256x32xbf16>
    %c0_5 = arith.constant 0 : index
    %c0_6 = arith.constant 0 : index
    %20 = vector.load %arg2[%c0_5, %c0_6] : memref<32x384xbf16, #tpu.memory_space<vmem>>, vector<32x384xbf16>
    %cst_7 = arith.constant dense<0.000000e+00> : vector<256x384xf32>
    %21 = tpu.matmul %19, %20, %cst_7 {dimension_numbers = #tpu.dot_dimension_numbers<[1], [0], [0], [1], [0, 0, 1, 1], [], []>} : vector<256x32xbf16>, vector<32x384xbf16>, vector<256x384xf32> -> vector<256x384xf32>
    %c0_8 = arith.constant 0 : index
    %c0_9 = arith.constant 0 : index
    %22 = vector.load %arg3[%c0_8, %c0_9] : memref<1x384xf32, #tpu.memory_space<vmem>>, vector<1x384xf32>
    %23 = vector.broadcast %22 : vector<1x384xf32> to vector<256x384xf32>
    %24 = arith.addf %21, %23 : vector<256x384xf32>
    %25 = vector.extract_strided_slice %24 {offsets = [0, 0], sizes = [256, 128], strides = [1, 1]} : vector<256x384xf32> to vector<256x128xf32>
    %26 = vector.extract_strided_slice %24 {offsets = [0, 128], sizes = [256, 128], strides = [1, 1]} : vector<256x384xf32> to vector<256x128xf32>
    %27 = vector.extract_strided_slice %24 {offsets = [0, 256], sizes = [256, 128], strides = [1, 1]} : vector<256x384xf32> to vector<256x128xf32>
    %28 = arith.truncf %25 : vector<256x128xf32> to vector<256x128xbf16>
    %29 = arith.truncf %26 : vector<256x128xf32> to vector<256x128xbf16>
    %cst_10 = arith.constant dense<0.000000e+00> : vector<256x256xf32>
    %30 = tpu.matmul %28, %29, %cst_10 {dimension_numbers = #tpu.dot_dimension_numbers<[1], [1], [0], [0], [0, 0, 1, 0], [], []>} : vector<256x128xbf16>, vector<256x128xbf16>, vector<256x256xf32> -> vector<256x256xf32>
    %c0_11 = arith.constant 0 : index
    %c0_12 = arith.constant 0 : index
    %31 = vector.load %arg6[%c0_11, %c0_12] : memref<256x256xf32, #tpu.memory_space<vmem>>, vector<256x256xf32>
    %32 = arith.addf %30, %31 : vector<256x256xf32>
    %cst_13 = arith.constant dense<0xFF800000> : vector<256xf32>
    %33 = vector.multi_reduction <maximumf>, %32, %cst_13 [1] : vector<256x256xf32> to vector<256xf32>
    %34 = vector.shape_cast %33 : vector<256xf32> to vector<256x1xf32>
    %35 = vector.broadcast %34 : vector<256x1xf32> to vector<256x256xf32>
    %36 = arith.subf %32, %35 : vector<256x256xf32>
    %37 = math.exp %36 : vector<256x256xf32>
    %cst_14 = arith.constant dense<0.000000e+00> : vector<256xf32>
    %38 = vector.multi_reduction <add>, %37, %cst_14 [1] : vector<256x256xf32> to vector<256xf32>
    %39 = vector.shape_cast %38 : vector<256xf32> to vector<256x1xf32>
    %40 = arith.truncf %37 : vector<256x256xf32> to vector<256x256xbf16>
    %41 = arith.truncf %27 : vector<256x128xf32> to vector<256x128xbf16>
    %cst_15 = arith.constant dense<0.000000e+00> : vector<256x128xf32>
    %42 = tpu.matmul %40, %41, %cst_15 {dimension_numbers = #tpu.dot_dimension_numbers<[1], [0], [0], [1], [0, 0, 1, 1], [], []>} : vector<256x256xbf16>, vector<256x128xbf16>, vector<256x128xf32> -> vector<256x128xf32>
    %43 = tpu.reciprocal %39 {approx = true} : vector<256x1xf32> -> vector<256x1xf32>
    %44 = vector.broadcast %43 : vector<256x1xf32> to vector<256x128xf32>
    %45 = arith.mulf %42, %44 : vector<256x128xf32>
    %46 = arith.truncf %45 : vector<256x128xf32> to vector<256x128xbf16>
    %c0_16 = arith.constant 0 : index
    %c0_17 = arith.constant 0 : index
    %47 = vector.load %arg4[%c0_16, %c0_17] : memref<128x32xbf16, #tpu.memory_space<vmem>>, vector<128x32xbf16>
    %cst_18 = arith.constant dense<0.000000e+00> : vector<256x32xf32>
    %48 = tpu.matmul %46, %47, %cst_18 {dimension_numbers = #tpu.dot_dimension_numbers<[1], [0], [0], [1], [0, 0, 1, 1], [], []>} : vector<256x128xbf16>, vector<128x32xbf16>, vector<256x32xf32> -> vector<256x32xf32>
    %c0_19 = arith.constant 0 : index
    %c0_20 = arith.constant 0 : index
    %49 = vector.load %arg5[%c0_19, %c0_20] : memref<1x32xf32, #tpu.memory_space<vmem>>, vector<1x32xf32>
    %50 = vector.broadcast %49 : vector<1x32xf32> to vector<256x32xf32>
    %51 = arith.addf %48, %50 : vector<256x32xf32>
    %c0_21 = arith.constant 0 : index
    %c0_22 = arith.constant 0 : index
    %52 = vector.load %arg7[%c0_21, %c0_22] : memref<256x32xf32, #tpu.memory_space<vmem>>, vector<256x32xf32>
    tpu.vector_store %arg7[%c0_21, %c0_22], %51 {strides = array<i32>} : memref<256x32xf32, #tpu.memory_space<vmem>>, vector<256x32xf32>,
    return
  }
  func.func @transform_0(%arg0: i32) -> (i32, i32) {
    %c0_i32 = arith.constant 0 : i32
    %c0_i32_0 = arith.constant 0 : i32
    return %arg0, %c0_i32 : i32, i32
  }
  func.func @transform_1(%arg0: i32) -> (i32, i32) {
    %c0_i32 = arith.constant 0 : i32
    %c0_i32_0 = arith.constant 0 : i32
    %c0_i32_1 = arith.constant 0 : i32
    return %c0_i32, %c0_i32_0 : i32, i32
  }
  func.func @transform_2(%arg0: i32) -> (i32, i32) {
    %c0_i32 = arith.constant 0 : i32
    %c0_i32_0 = arith.constant 0 : i32
    %c0_i32_1 = arith.constant 0 : i32
    return %c0_i32, %c0_i32_0 : i32, i32
  }
  func.func @transform_3(%arg0: i32) -> (i32, i32) {
    %c0_i32 = arith.constant 0 : i32
    %c0_i32_0 = arith.constant 0 : i32
    %c0_i32_1 = arith.constant 0 : i32
    return %c0_i32, %c0_i32_0 : i32, i32
  }
  func.func @transform_4(%arg0: i32) -> (i32, i32) {
    %c0_i32 = arith.constant 0 : i32
    %c0_i32_0 = arith.constant 0 : i32
    %c0_i32_1 = arith.constant 0 : i32
    return %c0_i32, %c0_i32_0 : i32, i32
  }
  func.func @transform_5(%arg0: i32) -> (i32, i32) {
    %c0_i32 = arith.constant 0 : i32
    %c0_i32_0 = arith.constant 0 : i32
    %c0_i32_1 = arith.constant 0 : i32
    return %c0_i32, %c0_i32_0 : i32, i32
  }
  func.func @transform_6(%arg0: i32) -> (i32, i32) {
    %c0_i32 = arith.constant 0 : i32
    %c0_i32_0 = arith.constant 0 : i32
    return %arg0, %c0_i32 : i32, i32
  }
}

</mosaic_0001>

<llo_original>
// kernel: tpu_custom_call.1
$region0: #{tpu_custom_call.1}
  #allocation0 [shape = 'u32[]', space=smem, size = 0x4, offset = 0x4, fixed_abs, tag = 'smem constant byte address 0x4 - core index']
  #allocation1 [shape = 'u32[72,128]{1,0:T(1,128)}', space=vmem, size = 0x9000, scoped, tag = 'internal scratch']
  %s0 = inlined_call_operand.vmem [shape: f32[256,32], index: 0, kind: input, shape index: {}]
  %s1 = inlined_call_operand.vmem [shape: bf16[32,384], index: 1, kind: input, shape index: {}]
  %s2 = inlined_call_operand.vmem [shape: f32[1,384], index: 2, kind: input, shape index: {}]
  %s3 = inlined_call_operand.vmem [shape: bf16[128,32], index: 3, kind: input, shape index: {}]
  %s4 = inlined_call_operand.vmem [shape: f32[1,32], index: 4, kind: input, shape index: {}]
  %s5 = inlined_call_operand.hbm [shape: f32[256,256], index: 5, kind: input, shape index: {}]
  %s6 = inlined_call_operand.vmem [shape: f32[256,32], index: 6, kind: output, shape index: {}]
  %s7 = sld [smem:[#allocation0]]
  $region38: #{tpu_custom_call.1} parent=0
    _
  %s9 = ssub.s32 1, %s7
  %s10 = scalar_select 0, %s9, %s7
  $region1: #{tpu_custom_call.1} parent=0
    #allocation2 [shape = 'u8[262144]{0}', space=vmem, size = 0x40000, scoped, tag = 'input window, operand 5, single buffered']
    #allocation3 [shape = 's32[1]{0}', space=sflag, size = 0x4, scoped, tag = 'scoped memory for tpu_custom_call.1']
    %11 = vsyncpa [#allocation3], 0
    // Predicated region
    $region2: #{tpu_custom_call.1} parent=1 // pred_check
      _
    $region3: #{tpu_custom_call.1} parent=1 // pred_check_branch
      %13 = sbr.rel (0) target = $region5
    $region4: #{tpu_custom_call.1} parent=1 // pred_region
      _
    $region5: #{tpu_custom_call.1} parent=1 // pred_fallthru
      _
    // Predicated region
    $region6: #{tpu_custom_call.1} parent=1 // pred_check
      _
    $region7: #{tpu_custom_call.1} parent=1 // pred_check_branch
      %15 = sbr.rel (0) target = $region9
    $region8: #{tpu_custom_call.1} parent=1 // pred_region
      _
    $region9: #{tpu_custom_call.1} parent=1 // pred_fallthru
      _
    // Predicated region
    $region10: #{tpu_custom_call.1} parent=1 // pred_check
      _
    $region11: #{tpu_custom_call.1} parent=1 // pred_check_branch
      %17 = sbr.rel (0) target = $region13
    $region12: #{tpu_custom_call.1} parent=1 // pred_region
      _
    $region13: #{tpu_custom_call.1} parent=1 // pred_fallthru
      _
    // Predicated region
    $region14: #{tpu_custom_call.1} parent=1 // pred_check
      _
    $region15: #{tpu_custom_call.1} parent=1 // pred_check_branch
      %19 = sbr.rel (0) target = $region17
    $region16: #{tpu_custom_call.1} parent=1 // pred_region
      _
    $region17: #{tpu_custom_call.1} parent=1 // pred_fallthru
      _
    // Predicated region
    $region18: #{tpu_custom_call.1} parent=1 // pred_check
      _
    $region19: #{tpu_custom_call.1} parent=1 // pred_check_branch
      %21 = sbr.rel (0) target = $region21
    $region20: #{tpu_custom_call.1} parent=1 // pred_region
      _
    $region21: #{tpu_custom_call.1} parent=1 // pred_fallthru
      _
    // Predicated region
    $region22: #{tpu_custom_call.1} parent=1 // pred_check
      _
    $region23: #{tpu_custom_call.1} parent=1 // pred_check_branch
      %23 = sbr.rel (0) target = $region25
    $region24: #{tpu_custom_call.1} parent=1 // pred_region
      %25 = vsyncadd [#allocation3], 0
      %s26 = sshll.u32 %s5, 4
      %s27 = int_to_ptr.hbm [resolvable:$true] %s26
      %s28 = sshll.u32 [#allocation2], 4
      %s29 = int_to_ptr.vmem [resolvable:$true] %s28
      %34 = dma.hbm_to_vmem [thread:$0]  %s27, 8192, %s29, [#allocation3], 256, 256, 16
    $region25: #{tpu_custom_call.1} parent=1 // pred_fallthru
      _
    // Predicated region
    $region26: #{tpu_custom_call.1} parent=1 // pred_check
      _
    $region27: #{tpu_custom_call.1} parent=1 // pred_check_branch
      %36 = sbr.rel (0) target = $region29
    $region28: #{tpu_custom_call.1} parent=1 // pred_region
      %38 = dma.done [#allocation3], 8192
    $region29: #{tpu_custom_call.1} parent=1 // pred_fallthru
      _
    %v40 = vld [vmem:[%s0] sm:$0xff]
    %v41 = vld [vmem:[%s0 + $0x8] sm:$0xff]
    %v42 = vld [vmem:[%s0 + $0x10] sm:$0xff]
    %v43 = vld [vmem:[%s0 + $0x18] sm:$0xff]
    %v44 = vld [vmem:[%s0 + $0x20] sm:$0xff]
    %v45 = vld [vmem:[%s0 + $0x28] sm:$0xff]
    %v46 = vld [vmem:[%s0 + $0x30] sm:$0xff]
    %v47 = vld [vmem:[%s0 + $0x38] sm:$0xff]
    %v48 = vld [vmem:[%s0 + $0x40] sm:$0xff]
    %v49 = vld [vmem:[%s0 + $0x48] sm:$0xff]
    %v50 = vld [vmem:[%s0 + $0x50] sm:$0xff]
    %v51 = vld [vmem:[%s0 + $0x58] sm:$0xff]
    %v52 = vld [vmem:[%s0 + $0x60] sm:$0xff]
    %v53 = vld [vmem:[%s0 + $0x68] sm:$0xff]
    %v54 = vld [vmem:[%s0 + $0x70] sm:$0xff]
    %v55 = vld [vmem:[%s0 + $0x78] sm:$0xff]
    %v56 = vld [vmem:[%s0 + $0x80] sm:$0xff]
    %v57 = vld [vmem:[%s0 + $0x88] sm:$0xff]
    %v58 = vld [vmem:[%s0 + $0x90] sm:$0xff]
    %v59 = vld [vmem:[%s0 + $0x98] sm:$0xff]
    %v60 = vld [vmem:[%s0 + $0xa0] sm:$0xff]
    %v61 = vld [vmem:[%s0 + $0xa8] sm:$0xff]
    %v62 = vld [vmem:[%s0 + $0xb0] sm:$0xff]
    %v63 = vld [vmem:[%s0 + $0xb8] sm:$0xff]
    %v64 = vld [vmem:[%s0 + $0xc0] sm:$0xff]
    %v65 = vld [vmem:[%s0 + $0xc8] sm:$0xff]
    %v66 = vld [vmem:[%s0 + $0xd0] sm:$0xff]
    %v67 = vld [vmem:[%s0 + $0xd8] sm:$0xff]
    %v68 = vld [vmem:[%s0 + $0xe0] sm:$0xff]
    %v69 = vld [vmem:[%s0 + $0xe8] sm:$0xff]
    %v70 = vld [vmem:[%s0 + $0xf0] sm:$0xff]
    %v71 = vld [vmem:[%s0 + $0xf8] sm:$0xff]
    %vm72 = vcmask 261120
    %v73 = vsel %vm72, %v40, 0.0
    %74 = vadd.xlane.f32.xlu0 %v73
    %v75 = vpop.xlane.xlu0 %74
    %v76 = vsel %vm72, %v41, 0.0
    %77 = vadd.xlane.f32.xlu0 %v76
    %v78 = vpop.xlane.xlu0 %77
    %v79 = vsel %vm72, %v42, 0.0
    %80 = vadd.xlane.f32.xlu0 %v79
    %v81 = vpop.xlane.xlu0 %80
    %v82 = vsel %vm72, %v43, 0.0
    %83 = vadd.xlane.f32.xlu0 %v82
    %v84 = vpop.xlane.xlu0 %83
    %v85 = vsel %vm72, %v44, 0.0
    %86 = vadd.xlane.f32.xlu0 %v85
    %v87 = vpop.xlane.xlu0 %86
    %v88 = vsel %vm72, %v45, 0.0
    %89 = vadd.xlane.f32.xlu0 %v88
    %v90 = vpop.xlane.xlu0 %89
    %v91 = vsel %vm72, %v46, 0.0
    %92 = vadd.xlane.f32.xlu0 %v91
    %v93 = vpop.xlane.xlu0 %92
    %v94 = vsel %vm72, %v47, 0.0
    %95 = vadd.xlane.f32.xlu0 %v94
    %v96 = vpop.xlane.xlu0 %95
    %v97 = vsel %vm72, %v48, 0.0
    %98 = vadd.xlane.f32.xlu0 %v97
    %v99 = vpop.xlane.xlu0 %98
    %v100 = vsel %vm72, %v49, 0.0
    %101 = vadd.xlane.f32.xlu0 %v100
    %v102 = vpop.xlane.xlu0 %101
    %v103 = vsel %vm72, %v50, 0.0
    %104 = vadd.xlane.f32.xlu0 %v103
    %v105 = vpop.xlane.xlu0 %104
    %v106 = vsel %vm72, %v51, 0.0
    %107 = vadd.xlane.f32.xlu0 %v106
    %v108 = vpop.xlane.xlu0 %107
    %v109 = vsel %vm72, %v52, 0.0
    %110 = vadd.xlane.f32.xlu0 %v109
    %v111 = vpop.xlane.xlu0 %110
    %v112 = vsel %vm72, %v53, 0.0
    %113 = vadd.xlane.f32.xlu0 %v112
    %v114 = vpop.xlane.xlu0 %113
    %v115 = vsel %vm72, %v54, 0.0
    %116 = vadd.xlane.f32.xlu0 %v115
    %v117 = vpop.xlane.xlu0 %116
    %v118 = vsel %vm72, %v55, 0.0
    %119 = vadd.xlane.f32.xlu0 %v118
    %v120 = vpop.xlane.xlu0 %119
    %v121 = vsel %vm72, %v56, 0.0
    %122 = vadd.xlane.f32.xlu0 %v121
    %v123 = vpop.xlane.xlu0 %122
    %v124 = vsel %vm72, %v57, 0.0
    %125 = vadd.xlane.f32.xlu0 %v124
    %v126 = vpop.xlane.xlu0 %125
    %v127 = vsel %vm72, %v58, 0.0
    %128 = vadd.xlane.f32.xlu0 %v127
    %v129 = vpop.xlane.xlu0 %128
    %v130 = vsel %vm72, %v59, 0.0
    %131 = vadd.xlane.f32.xlu0 %v130
    %v132 = vpop.xlane.xlu0 %131
    %v133 = vsel %vm72, %v60, 0.0
    %134 = vadd.xlane.f32.xlu0 %v133
    %v135 = vpop.xlane.xlu0 %134
    %v136 = vsel %vm72, %v61, 0.0
    %137 = vadd.xlane.f32.xlu0 %v136
    %v138 = vpop.xlane.xlu0 %137
    %v139 = vsel %vm72, %v62, 0.0
    %140 = vadd.xlane.f32.xlu0 %v139
    %v141 = vpop.xlane.xlu0 %140
    %v142 = vsel %vm72, %v63, 0.0
    %143 = vadd.xlane.f32.xlu0 %v142
    %v144 = vpop.xlane.xlu0 %143
    %v145 = vsel %vm72, %v64, 0.0
    %146 = vadd.xlane.f32.xlu0 %v145
    %v147 = vpop.xlane.xlu0 %146
    %v148 = vsel %vm72, %v65, 0.0
    %149 = vadd.xlane.f32.xlu0 %v148
    %v150 = vpop.xlane.xlu0 %149
    %v151 = vsel %vm72, %v66, 0.0
    %152 = vadd.xlane.f32.xlu0 %v151
    %v153 = vpop.xlane.xlu0 %152
    %v154 = vsel %vm72, %v67, 0.0
    %155 = vadd.xlane.f32.xlu0 %v154
    %v156 = vpop.xlane.xlu0 %155
    %v157 = vsel %vm72, %v68, 0.0
    %158 = vadd.xlane.f32.xlu0 %v157
    %v159 = vpop.xlane.xlu0 %158
    %v160 = vsel %vm72, %v69, 0.0
    %161 = vadd.xlane.f32.xlu0 %v160
    %v162 = vpop.xlane.xlu0 %161
    %v163 = vsel %vm72, %v70, 0.0
    %164 = vadd.xlane.f32.xlu0 %v163
    %v165 = vpop.xlane.xlu0 %164
    %v166 = vsel %vm72, %v71, 0.0
    %167 = vadd.xlane.f32.xlu0 %v166
    %v168 = vpop.xlane.xlu0 %167
    %v169 = vrcp.pop 32.0
    %v170 = vmul.f32 32.0, %v169
    %v171 = vsub.f32 1.0, %v170
    %v172 = vmul.f32 %v169, %v171
    %v173 = vadd.f32 %v169, %v172
    %vm174 = vweird.f32 %v169
    %v175 = vsel %vm174, %v169, %v173
    %v176 = vmul.f32 %v75, %v175
    %v177 = vmul.f32 %v78, %v175
    %v178 = vmul.f32 %v81, %v175
    %v179 = vmul.f32 %v84, %v175
    %v180 = vmul.f32 %v87, %v175
    %v181 = vmul.f32 %v90, %v175
    %v182 = vmul.f32 %v93, %v175
    %v183 = vmul.f32 %v96, %v175
    %v184 = vmul.f32 %v99, %v175
    %v185 = vmul.f32 %v102, %v175
    %v186 = vmul.f32 %v105, %v175
    %v187 = vmul.f32 %v108, %v175
    %v188 = vmul.f32 %v111, %v175
    %v189 = vmul.f32 %v114, %v175
    %v190 = vmul.f32 %v117, %v175
    %v191 = vmul.f32 %v120, %v175
    %v192 = vmul.f32 %v123, %v175
    %v193 = vmul.f32 %v126, %v175
    %v194 = vmul.f32 %v129, %v175
    %v195 = vmul.f32 %v132, %v175
    %v196 = vmul.f32 %v135, %v175
    %v197 = vmul.f32 %v138, %v175
    %v198 = vmul.f32 %v141, %v175
    %v199 = vmul.f32 %v144, %v175
    %v200 = vmul.f32 %v147, %v175
    %v201 = vmul.f32 %v150, %v175
    %v202 = vmul.f32 %v153, %v175
    %v203 = vmul.f32 %v156, %v175
    %v204 = vmul.f32 %v159, %v175
    %v205 = vmul.f32 %v162, %v175
    %v206 = vmul.f32 %v165, %v175
    %v207 = vmul.f32 %v168, %v175
    %v208 = vsub.f32 %v40, %v176
    %v209 = vsub.f32 %v41, %v177
    %v210 = vsub.f32 %v42, %v178
    %v211 = vsub.f32 %v43, %v179
    %v212 = vsub.f32 %v44, %v180
    %v213 = vsub.f32 %v45, %v181
    %v214 = vsub.f32 %v46, %v182
    %v215 = vsub.f32 %v47, %v183
    %v216 = vsub.f32 %v48, %v184
    %v217 = vsub.f32 %v49, %v185
    %v218 = vsub.f32 %v50, %v186
    %v219 = vsub.f32 %v51, %v187
    %v220 = vsub.f32 %v52, %v188
    %v221 = vsub.f32 %v53, %v189
    %v222 = vsub.f32 %v54, %v190
    %v223 = vsub.f32 %v55, %v191
    %v224 = vsub.f32 %v56, %v192
    %v225 = vsub.f32 %v57, %v193
    %v226 = vsub.f32 %v58, %v194
    %v227 = vsub.f32 %v59, %v195
    %v228 = vsub.f32 %v60, %v196
    %v229 = vsub.f32 %v61, %v197
    %v230 = vsub.f32 %v62, %v198
    %v231 = vsub.f32 %v63, %v199
    %v232 = vsub.f32 %v64, %v200
    %v233 = vsub.f32 %v65, %v201
    %v234 = vsub.f32 %v66, %v202
    %v235 = vsub.f32 %v67, %v203
    %v236 = vsub.f32 %v68, %v204
    %v237 = vsub.f32 %v69, %v205
    %v238 = vsub.f32 %v70, %v206
    %v239 = vsub.f32 %v71, %v207
    %v240 = vmul.f32 %v208, %v208
    %v241 = vmul.f32 %v209, %v209
    %v242 = vmul.f32 %v210, %v210
    %v243 = vmul.f32 %v211, %v211
    %v244 = vmul.f32 %v212, %v212
    %v245 = vmul.f32 %v213, %v213
    %v246 = vmul.f32 %v214, %v214
    %v247 = vmul.f32 %v215, %v215
    %v248 = vmul.f32 %v216, %v216
    %v249 = vmul.f32 %v217, %v217
    %v250 = vmul.f32 %v218, %v218
    %v251 = vmul.f32 %v219, %v219
    %v252 = vmul.f32 %v220, %v220
    %v253 = vmul.f32 %v221, %v221
    %v254 = vmul.f32 %v222, %v222
    %v255 = vmul.f32 %v223, %v223
    %v256 = vmul.f32 %v224, %v224
    %v257 = vmul.f32 %v225, %v225
    %v258 = vmul.f32 %v226, %v226
    %v259 = vmul.f32 %v227, %v227
    %v260 = vmul.f32 %v228, %v228
    %v261 = vmul.f32 %v229, %v229
    %v262 = vmul.f32 %v230, %v230
    %v263 = vmul.f32 %v231, %v231
    %v264 = vmul.f32 %v232, %v232
    %v265 = vmul.f32 %v233, %v233
    %v266 = vmul.f32 %v234, %v234
    %v267 = vmul.f32 %v235, %v235
    %v268 = vmul.f32 %v236, %v236
    %v269 = vmul.f32 %v237, %v237
    %v270 = vmul.f32 %v238, %v238
    %v271 = vmul.f32 %v239, %v239
    %v272 = vsel %vm72, %v240, 0.0
    %273 = vadd.xlane.f32.xlu0 %v272
    %v274 = vpop.xlane.xlu0 %273
    %v275 = vsel %vm72, %v241, 0.0
    %276 = vadd.xlane.f32.xlu0 %v275
    %v277 = vpop.xlane.xlu0 %276
    %v278 = vsel %vm72, %v242, 0.0
    %279 = vadd.xlane.f32.xlu0 %v278
    %v280 = vpop.xlane.xlu0 %279
    %v281 = vsel %vm72, %v243, 0.0
    %282 = vadd.xlane.f32.xlu0 %v281
    %v283 = vpop.xlane.xlu0 %282
    %v284 = vsel %vm72, %v244, 0.0
    %285 = vadd.xlane.f32.xlu0 %v284
    %v286 = vpop.xlane.xlu0 %285
    %v287 = vsel %vm72, %v245, 0.0
    %288 = vadd.xlane.f32.xlu0 %v287
    %v289 = vpop.xlane.xlu0 %288
    %v290 = vsel %vm72, %v246, 0.0
    %291 = vadd.xlane.f32.xlu0 %v290
    %v292 = vpop.xlane.xlu0 %291
    %v293 = vsel %vm72, %v247, 0.0
    %294 = vadd.xlane.f32.xlu0 %v293
    %v295 = vpop.xlane.xlu0 %294
    %v296 = vsel %vm72, %v248, 0.0
    %297 = vadd.xlane.f32.xlu0 %v296
    %v298 = vpop.xlane.xlu0 %297
    %v299 = vsel %vm72, %v249, 0.0
    %300 = vadd.xlane.f32.xlu0 %v299
    %v301 = vpop.xlane.xlu0 %300
    %v302 = vsel %vm72, %v250, 0.0
    %303 = vadd.xlane.f32.xlu0 %v302
    %v304 = vpop.xlane.xlu0 %303
    %v305 = vsel %vm72, %v251, 0.0
    %306 = vadd.xlane.f32.xlu0 %v305
    %v307 = vpop.xlane.xlu0 %306
    %v308 = vsel %vm72, %v252, 0.0
    %309 = vadd.xlane.f32.xlu0 %v308
    %v310 = vpop.xlane.xlu0 %309
    %v311 = vsel %vm72, %v253, 0.0
    %312 = vadd.xlane.f32.xlu0 %v311
    %v313 = vpop.xlane.xlu0 %312
    %v314 = vsel %vm72, %v254, 0.0
    %315 = vadd.xlane.f32.xlu0 %v314
    %v316 = vpop.xlane.xlu0 %315
    %v317 = vsel %vm72, %v255, 0.0
    %318 = vadd.xlane.f32.xlu0 %v317
    %v319 = vpop.xlane.xlu0 %318
    %v320 = vsel %vm72, %v256, 0.0
    %321 = vadd.xlane.f32.xlu0 %v320
    %v322 = vpop.xlane.xlu0 %321
    %v323 = vsel %vm72, %v257, 0.0
    %324 = vadd.xlane.f32.xlu0 %v323
    %v325 = vpop.xlane.xlu0 %324
    %v326 = vsel %vm72, %v258, 0.0
    %327 = vadd.xlane.f32.xlu0 %v326
    %v328 = vpop.xlane.xlu0 %327
    %v329 = vsel %vm72, %v259, 0.0
    %330 = vadd.xlane.f32.xlu0 %v329
    %v331 = vpop.xlane.xlu0 %330
    %v332 = vsel %vm72, %v260, 0.0
    %333 = vadd.xlane.f32.xlu0 %v332
    %v334 = vpop.xlane.xlu0 %333
    %v335 = vsel %vm72, %v261, 0.0
    %336 = vadd.xlane.f32.xlu0 %v335
    %v337 = vpop.xlane.xlu0 %336
    %v338 = vsel %vm72, %v262, 0.0
    %339 = vadd.xlane.f32.xlu0 %v338
    %v340 = vpop.xlane.xlu0 %339
    %v341 = vsel %vm72, %v263, 0.0
    %342 = vadd.xlane.f32.xlu0 %v341
    %v343 = vpop.xlane.xlu0 %342
    %v344 = vsel %vm72, %v264, 0.0
    %345 = vadd.xlane.f32.xlu0 %v344
    %v346 = vpop.xlane.xlu0 %345
    %v347 = vsel %vm72, %v265, 0.0
    %348 = vadd.xlane.f32.xlu0 %v347
    %v349 = vpop.xlane.xlu0 %348
    %v350 = vsel %vm72, %v266, 0.0
    %351 = vadd.xlane.f32.xlu0 %v350
    %v352 = vpop.xlane.xlu0 %351
    %v353 = vsel %vm72, %v267, 0.0
    %354 = vadd.xlane.f32.xlu0 %v353
    %v355 = vpop.xlane.xlu0 %354
    %v356 = vsel %vm72, %v268, 0.0
    %357 = vadd.xlane.f32.xlu0 %v356
    %v358 = vpop.xlane.xlu0 %357
    %v359 = vsel %vm72, %v269, 0.0
    %360 = vadd.xlane.f32.xlu0 %v359
    %v361 = vpop.xlane.xlu0 %360
    %v362 = vsel %vm72, %v270, 0.0
    %363 = vadd.xlane.f32.xlu0 %v362
    %v364 = vpop.xlane.xlu0 %363
    %v365 = vsel %vm72, %v271, 0.0
    %366 = vadd.xlane.f32.xlu0 %v365
    %v367 = vpop.xlane.xlu0 %366
    %v368 = vmul.f32 %v274, %v175
    %v369 = vmul.f32 %v277, %v175
    %v370 = vmul.f32 %v280, %v175
    %v371 = vmul.f32 %v283, %v175
    %v372 = vmul.f32 %v286, %v175
    %v373 = vmul.f32 %v289, %v175
    %v374 = vmul.f32 %v292, %v175
    %v375 = vmul.f32 %v295, %v175
    %v376 = vmul.f32 %v298, %v175
    %v377 = vmul.f32 %v301, %v175
    %v378 = vmul.f32 %v304, %v175
    %v379 = vmul.f32 %v307, %v175
    %v380 = vmul.f32 %v310, %v175
    %v381 = vmul.f32 %v313, %v175
    %v382 = vmul.f32 %v316, %v175
    %v383 = vmul.f32 %v319, %v175
    %v384 = vmul.f32 %v322, %v175
    %v385 = vmul.f32 %v325, %v175
    %v386 = vmul.f32 %v328, %v175
    %v387 = vmul.f32 %v331, %v175
    %v388 = vmul.f32 %v334, %v175
    %v389 = vmul.f32 %v337, %v175
    %v390 = vmul.f32 %v340, %v175
    %v391 = vmul.f32 %v343, %v175
    %v392 = vmul.f32 %v346, %v175
    %v393 = vmul.f32 %v349, %v175
    %v394 = vmul.f32 %v352, %v175
    %v395 = vmul.f32 %v355, %v175
    %v396 = vmul.f32 %v358, %v175
    %v397 = vmul.f32 %v361, %v175
    %v398 = vmul.f32 %v364, %v175
    %v399 = vmul.f32 %v367, %v175
    %v400 = vadd.f32 %v368, 1e-05
    %v401 = vadd.f32 %v369, 1e-05
    %v402 = vadd.f32 %v370, 1e-05
    %v403 = vadd.f32 %v371, 1e-05
    %v404 = vadd.f32 %v372, 1e-05
    %v405 = vadd.f32 %v373, 1e-05
    %v406 = vadd.f32 %v374, 1e-05
    %v407 = vadd.f32 %v375, 1e-05
    %v408 = vadd.f32 %v376, 1e-05
    %v409 = vadd.f32 %v377, 1e-05
    %v410 = vadd.f32 %v378, 1e-05
    %v411 = vadd.f32 %v379, 1e-05
    %v412 = vadd.f32 %v380, 1e-05
    %v413 = vadd.f32 %v381, 1e-05
    %v414 = vadd.f32 %v382, 1e-05
    %v415 = vadd.f32 %v383, 1e-05
    %v416 = vadd.f32 %v384, 1e-05
    %v417 = vadd.f32 %v385, 1e-05
    %v418 = vadd.f32 %v386, 1e-05
    %v419 = vadd.f32 %v387, 1e-05
    %v420 = vadd.f32 %v388, 1e-05
    %v421 = vadd.f32 %v389, 1e-05
    %v422 = vadd.f32 %v390, 1e-05
    %v423 = vadd.f32 %v391, 1e-05
    %v424 = vadd.f32 %v392, 1e-05
    %v425 = vadd.f32 %v393, 1e-05
    %v426 = vadd.f32 %v394, 1e-05
    %v427 = vadd.f32 %v395, 1e-05
    %v428 = vadd.f32 %v396, 1e-05
    %v429 = vadd.f32 %v397, 1e-05
    %v430 = vadd.f32 %v398, 1e-05
    %v431 = vadd.f32 %v399, 1e-05
    %v432 = vrsqrt.pop %v400
    %v433 = vmul.f32 %v432, %v400
    %v434 = vmul.f32 %v433, %v432
    %v435 = vmul.f32 0.5, %v434
    %v436 = vsub.f32 1.5, %v435
    %v437 = vmul.f32 %v432, %v436
    %vm438 = vweird.f32 %v400
    %vm439 = vweird.f32 %v432
    %vm440 = vmor %vm438, %vm439
    %v441 = vsel %vm440, %v432, %v437
    %v442 = vrsqrt.pop %v401
    %v443 = vmul.f32 %v442, %v401
    %v444 = vmul.f32 %v443, %v442
    %v445 = vmul.f32 0.5, %v444
    %v446 = vsub.f32 1.5, %v445
    %v447 = vmul.f32 %v442, %v446
    %vm448 = vweird.f32 %v401
    %vm449 = vweird.f32 %v442
    %vm450 = vmor %vm448, %vm449
    %v451 = vsel %vm450, %v442, %v447
    %v452 = vrsqrt.pop %v402
    %v453 = vmul.f32 %v452, %v402
    %v454 = vmul.f32 %v453, %v452
    %v455 = vmul.f32 0.5, %v454
    %v456 = vsub.f32 1.5, %v455
    %v457 = vmul.f32 %v452, %v456
    %vm458 = vweird.f32 %v402
    %vm459 = vweird.f32 %v452
    %vm460 = vmor %vm458, %vm459
    %v461 = vsel %vm460, %v452, %v457
    %v462 = vrsqrt.pop %v403
    %v463 = vmul.f32 %v462, %v403
    %v464 = vmul.f32 %v463, %v462
    %v465 = vmul.f32 0.5, %v464
    %v466 = vsub.f32 1.5, %v465
    %v467 = vmul.f32 %v462, %v466
    %vm468 = vweird.f32 %v403
    %vm469 = vweird.f32 %v462
    %vm470 = vmor %vm468, %vm469
    %v471 = vsel %vm470, %v462, %v467
    %v472 = vrsqrt.pop %v404
    %v473 = vmul.f32 %v472, %v404
    %v474 = vmul.f32 %v473, %v472
    %v475 = vmul.f32 0.5, %v474
    %v476 = vsub.f32 1.5, %v475
    %v477 = vmul.f32 %v472, %v476
    %vm478 = vweird.f32 %v404
    %vm479 = vweird.f32 %v472
    %vm480 = vmor %vm478, %vm479
    %v481 = vsel %vm480, %v472, %v477
    %v482 = vrsqrt.pop %v405
    %v483 = vmul.f32 %v482, %v405
    %v484 = vmul.f32 %v483, %v482
    %v485 = vmul.f32 0.5, %v484
    %v486 = vsub.f32 1.5, %v485
    %v487 = vmul.f32 %v482, %v486
    %vm488 = vweird.f32 %v405
    %vm489 = vweird.f32 %v482
    %vm490 = vmor %vm488, %vm489
    %v491 = vsel %vm490, %v482, %v487
    %v492 = vrsqrt.pop %v406
    %v493 = vmul.f32 %v492, %v406
    %v494 = vmul.f32 %v493, %v492
    %v495 = vmul.f32 0.5, %v494
    %v496 = vsub.f32 1.5, %v495
    %v497 = vmul.f32 %v492, %v496
    %vm498 = vweird.f32 %v406
    %vm499 = vweird.f32 %v492
    %vm500 = vmor %vm498, %vm499
    %v501 = vsel %vm500, %v492, %v497
    %v502 = vrsqrt.pop %v407
    %v503 = vmul.f32 %v502, %v407
    %v504 = vmul.f32 %v503, %v502
    %v505 = vmul.f32 0.5, %v504
    %v506 = vsub.f32 1.5, %v505
    %v507 = vmul.f32 %v502, %v506
    %vm508 = vweird.f32 %v407
    %vm509 = vweird.f32 %v502
    %vm510 = vmor %vm508, %vm509
    %v511 = vsel %vm510, %v502, %v507
    %v512 = vrsqrt.pop %v408
    %v513 = vmul.f32 %v512, %v408
    %v514 = vmul.f32 %v513, %v512
    %v515 = vmul.f32 0.5, %v514
    %v516 = vsub.f32 1.5, %v515
    %v517 = vmul.f32 %v512, %v516
    %vm518 = vweird.f32 %v408
    %vm519 = vweird.f32 %v512
    %vm520 = vmor %vm518, %vm519
    %v521 = vsel %vm520, %v512, %v517
    %v522 = vrsqrt.pop %v409
    %v523 = vmul.f32 %v522, %v409
    %v524 = vmul.f32 %v523, %v522
    %v525 = vmul.f32 0.5, %v524
    %v526 = vsub.f32 1.5, %v525
    %v527 = vmul.f32 %v522, %v526
    %vm528 = vweird.f32 %v409
    %vm529 = vweird.f32 %v522
    %vm530 = vmor %vm528, %vm529
    %v531 = vsel %vm530, %v522, %v527
    %v532 = vrsqrt.pop %v410
    %v533 = vmul.f32 %v532, %v410
    %v534 = vmul.f32 %v533, %v532
    %v535 = vmul.f32 0.5, %v534
    %v536 = vsub.f32 1.5, %v535
    %v537 = vmul.f32 %v532, %v536
    %vm538 = vweird.f32 %v410
    %vm539 = vweird.f32 %v532
    %vm540 = vmor %vm538, %vm539
    %v541 = vsel %vm540, %v532, %v537
    %v542 = vrsqrt.pop %v411
    %v543 = vmul.f32 %v542, %v411
    %v544 = vmul.f32 %v543, %v542
    %v545 = vmul.f32 0.5, %v544
    %v546 = vsub.f32 1.5, %v545
    %v547 = vmul.f32 %v542, %v546
    %vm548 = vweird.f32 %v411
    %vm549 = vweird.f32 %v542
    %vm550 = vmor %vm548, %vm549
    %v551 = vsel %vm550, %v542, %v547
    %v552 = vrsqrt.pop %v412
    %v553 = vmul.f32 %v552, %v412
    %v554 = vmul.f32 %v553, %v552
    %v555 = vmul.f32 0.5, %v554
    %v556 = vsub.f32 1.5, %v555
    %v557 = vmul.f32 %v552, %v556
    %vm558 = vweird.f32 %v412
    %vm559 = vweird.f32 %v552
    %vm560 = vmor %vm558, %vm559
    %v561 = vsel %vm560, %v552, %v557
    %v562 = vrsqrt.pop %v413
    %v563 = vmul.f32 %v562, %v413
    %v564 = vmul.f32 %v563, %v562
    %v565 = vmul.f32 0.5, %v564
    %v566 = vsub.f32 1.5, %v565
    %v567 = vmul.f32 %v562, %v566
    %vm568 = vweird.f32 %v413
    %vm569 = vweird.f32 %v562
    %vm570 = vmor %vm568, %vm569
    %v571 = vsel %vm570, %v562, %v567
    %v572 = vrsqrt.pop %v414
    %v573 = vmul.f32 %v572, %v414
    %v574 = vmul.f32 %v573, %v572
    %v575 = vmul.f32 0.5, %v574
    %v576 = vsub.f32 1.5, %v575
    %v577 = vmul.f32 %v572, %v576
    %vm578 = vweird.f32 %v414
    %vm579 = vweird.f32 %v572
    %vm580 = vmor %vm578, %vm579
    %v581 = vsel %vm580, %v572, %v577
    %v582 = vrsqrt.pop %v415
    %v583 = vmul.f32 %v582, %v415
    %v584 = vmul.f32 %v583, %v582
    %v585 = vmul.f32 0.5, %v584
    %v586 = vsub.f32 1.5, %v585
    %v587 = vmul.f32 %v582, %v586
    %vm588 = vweird.f32 %v415
    %vm589 = vweird.f32 %v582
    %vm590 = vmor %vm588, %vm589
    %v591 = vsel %vm590, %v582, %v587
    %v592 = vrsqrt.pop %v416
    %v593 = vmul.f32 %v592, %v416
    %v594 = vmul.f32 %v593, %v592
    %v595 = vmul.f32 0.5, %v594
    %v596 = vsub.f32 1.5, %v595
    %v597 = vmul.f32 %v592, %v596
    %vm598 = vweird.f32 %v416
    %vm599 = vweird.f32 %v592
    %vm600 = vmor %vm598, %vm599
    %v601 = vsel %vm600, %v592, %v597
    %v602 = vrsqrt.pop %v417
    %v603 = vmul.f32 %v602, %v417
    %v604 = vmul.f32 %v603, %v602
    %v605 = vmul.f32 0.5, %v604
    %v606 = vsub.f32 1.5, %v605
    %v607 = vmul.f32 %v602, %v606
    %vm608 = vweird.f32 %v417
    %vm609 = vweird.f32 %v602
    %vm610 = vmor %vm608, %vm609
    %v611 = vsel %vm610, %v602, %v607
    %v612 = vrsqrt.pop %v418
    %v613 = vmul.f32 %v612, %v418
    %v614 = vmul.f32 %v613, %v612
    %v615 = vmul.f32 0.5, %v614
    %v616 = vsub.f32 1.5, %v615
    %v617 = vmul.f32 %v612, %v616
    %vm618 = vweird.f32 %v418
    %vm619 = vweird.f32 %v612
    %vm620 = vmor %vm618, %vm619
    %v621 = vsel %vm620, %v612, %v617
    %v622 = vrsqrt.pop %v419
    %v623 = vmul.f32 %v622, %v419
    %v624 = vmul.f32 %v623, %v622
    %v625 = vmul.f32 0.5, %v624
    %v626 = vsub.f32 1.5, %v625
    %v627 = vmul.f32 %v622, %v626
    %vm628 = vweird.f32 %v419
    %vm629 = vweird.f32 %v622
    %vm630 = vmor %vm628, %vm629
    %v631 = vsel %vm630, %v622, %v627
    %v632 = vrsqrt.pop %v420
    %v633 = vmul.f32 %v632, %v420
    %v634 = vmul.f32 %v633, %v632
    %v635 = vmul.f32 0.5, %v634
    %v636 = vsub.f32 1.5, %v635
    %v637 = vmul.f32 %v632, %v636
    %vm638 = vweird.f32 %v420
    %vm639 = vweird.f32 %v632
    %vm640 = vmor %vm638, %vm639
    %v641 = vsel %vm640, %v632, %v637
    %v642 = vrsqrt.pop %v421
    %v643 = vmul.f32 %v642, %v421
    %v644 = vmul.f32 %v643, %v642
    %v645 = vmul.f32 0.5, %v644
    %v646 = vsub.f32 1.5, %v645
    %v647 = vmul.f32 %v642, %v646
    %vm648 = vweird.f32 %v421
    %vm649 = vweird.f32 %v642
    %vm650 = vmor %vm648, %vm649
    %v651 = vsel %vm650, %v642, %v647
    %v652 = vrsqrt.pop %v422
    %v653 = vmul.f32 %v652, %v422
    %v654 = vmul.f32 %v653, %v652
    %v655 = vmul.f32 0.5, %v654
    %v656 = vsub.f32 1.5, %v655
    %v657 = vmul.f32 %v652, %v656
    %vm658 = vweird.f32 %v422
    %vm659 = vweird.f32 %v652
    %vm660 = vmor %vm658, %vm659
    %v661 = vsel %vm660, %v652, %v657
    %v662 = vrsqrt.pop %v423
    %v663 = vmul.f32 %v662, %v423
    %v664 = vmul.f32 %v663, %v662
    %v665 = vmul.f32 0.5, %v664
    %v666 = vsub.f32 1.5, %v665
    %v667 = vmul.f32 %v662, %v666
    %vm668 = vweird.f32 %v423
    %vm669 = vweird.f32 %v662
    %vm670 = vmor %vm668, %vm669
    %v671 = vsel %vm670, %v662, %v667
    %v672 = vrsqrt.pop %v424
    %v673 = vmul.f32 %v672, %v424
    %v674 = vmul.f32 %v673, %v672
    %v675 = vmul.f32 0.5, %v674
    %v676 = vsub.f32 1.5, %v675
    %v677 = vmul.f32 %v672, %v676
    %vm678 = vweird.f32 %v424
    %vm679 = vweird.f32 %v672
    %vm680 = vmor %vm678, %vm679
    %v681 = vsel %vm680, %v672, %v677
    %v682 = vrsqrt.pop %v425
    %v683 = vmul.f32 %v682, %v425
    %v684 = vmul.f32 %v683, %v682
    %v685 = vmul.f32 0.5, %v684
    %v686 = vsub.f32 1.5, %v685
    %v687 = vmul.f32 %v682, %v686
    %vm688 = vweird.f32 %v425
    %vm689 = vweird.f32 %v682
    %vm690 = vmor %vm688, %vm689
    %v691 = vsel %vm690, %v682, %v687
    %v692 = vrsqrt.pop %v426
    %v693 = vmul.f32 %v692, %v426
    %v694 = vmul.f32 %v693, %v692
    %v695 = vmul.f32 0.5, %v694
    %v696 = vsub.f32 1.5, %v695
    %v697 = vmul.f32 %v692, %v696
    %vm698 = vweird.f32 %v426
    %vm699 = vweird.f32 %v692
    %vm700 = vmor %vm698, %vm699
    %v701 = vsel %vm700, %v692, %v697
    %v702 = vrsqrt.pop %v427
    %v703 = vmul.f32 %v702, %v427
    %v704 = vmul.f32 %v703, %v702
    %v705 = vmul.f32 0.5, %v704
    %v706 = vsub.f32 1.5, %v705
    %v707 = vmul.f32 %v702, %v706
    %vm708 = vweird.f32 %v427
    %vm709 = vweird.f32 %v702
    %vm710 = vmor %vm708, %vm709
    %v711 = vsel %vm710, %v702, %v707
    %v712 = vrsqrt.pop %v428
    %v713 = vmul.f32 %v712, %v428
    %v714 = vmul.f32 %v713, %v712
    %v715 = vmul.f32 0.5, %v714
    %v716 = vsub.f32 1.5, %v715
    %v717 = vmul.f32 %v712, %v716
    %vm718 = vweird.f32 %v428
    %vm719 = vweird.f32 %v712
    %vm720 = vmor %vm718, %vm719
    %v721 = vsel %vm720, %v712, %v717
    %v722 = vrsqrt.pop %v429
    %v723 = vmul.f32 %v722, %v429
    %v724 = vmul.f32 %v723, %v722
    %v725 = vmul.f32 0.5, %v724
    %v726 = vsub.f32 1.5, %v725
    %v727 = vmul.f32 %v722, %v726
    %vm728 = vweird.f32 %v429
    %vm729 = vweird.f32 %v722
    %vm730 = vmor %vm728, %vm729
    %v731 = vsel %vm730, %v722, %v727
    %v732 = vrsqrt.pop %v430
    %v733 = vmul.f32 %v732, %v430
    %v734 = vmul.f32 %v733, %v732
    %v735 = vmul.f32 0.5, %v734
    %v736 = vsub.f32 1.5, %v735
    %v737 = vmul.f32 %v732, %v736
    %vm738 = vweird.f32 %v430
    %vm739 = vweird.f32 %v732
    %vm740 = vmor %vm738, %vm739
    %v741 = vsel %vm740, %v732, %v737
    %v742 = vrsqrt.pop %v431
    %v743 = vmul.f32 %v742, %v431
    %v744 = vmul.f32 %v743, %v742
    %v745 = vmul.f32 0.5, %v744
    %v746 = vsub.f32 1.5, %v745
    %v747 = vmul.f32 %v742, %v746
    %vm748 = vweird.f32 %v431
    %vm749 = vweird.f32 %v742
    %vm750 = vmor %vm748, %vm749
    %v751 = vsel %vm750, %v742, %v747
    %v752 = vmul.f32 %v208, %v441
    %v753 = vmul.f32 %v209, %v451
    %v754 = vmul.f32 %v210, %v461
    %v755 = vmul.f32 %v211, %v471
    %v756 = vmul.f32 %v212, %v481
    %v757 = vmul.f32 %v213, %v491
    %v758 = vmul.f32 %v214, %v501
    %v759 = vmul.f32 %v215, %v511
    %v760 = vmul.f32 %v216, %v521
    %v761 = vmul.f32 %v217, %v531
    %v762 = vmul.f32 %v218, %v541
    %v763 = vmul.f32 %v219, %v551
    %v764 = vmul.f32 %v220, %v561
    %v765 = vmul.f32 %v221, %v571
    %v766 = vmul.f32 %v222, %v581
    %v767 = vmul.f32 %v223, %v591
    %v768 = vmul.f32 %v224, %v601
    %v769 = vmul.f32 %v225, %v611
    %v770 = vmul.f32 %v226, %v621
    %v771 = vmul.f32 %v227, %v631
    %v772 = vmul.f32 %v228, %v641
    %v773 = vmul.f32 %v229, %v651
    %v774 = vmul.f32 %v230, %v661
    %v775 = vmul.f32 %v231, %v671
    %v776 = vmul.f32 %v232, %v681
    %v777 = vmul.f32 %v233, %v691
    %v778 = vmul.f32 %v234, %v701
    %v779 = vmul.f32 %v235, %v711
    %v780 = vmul.f32 %v236, %v721
    %v781 = vmul.f32 %v237, %v731
    %v782 = vmul.f32 %v238, %v741
    %v783 = vmul.f32 %v239, %v751
    %v784 = vpack.c.bf16 %v753, %v752
    %v785 = vpack.c.bf16 %v755, %v754
    %v786 = vpack.c.bf16 %v757, %v756
    %v787 = vpack.c.bf16 %v759, %v758
    %v788 = vpack.c.bf16 %v761, %v760
    %v789 = vpack.c.bf16 %v763, %v762
    %v790 = vpack.c.bf16 %v765, %v764
    %v791 = vpack.c.bf16 %v767, %v766
    %v792 = vpack.c.bf16 %v769, %v768
    %v793 = vpack.c.bf16 %v771, %v770
    %v794 = vpack.c.bf16 %v773, %v772
    %v795 = vpack.c.bf16 %v775, %v774
    %v796 = vpack.c.bf16 %v777, %v776
    %v797 = vpack.c.bf16 %v779, %v778
    %v798 = vpack.c.bf16 %v781, %v780
    %v799 = vpack.c.bf16 %v783, %v782
    %v800 = vld [vmem:[%s1] sm:$0xff]
    %v801 = vld [vmem:[%s1 + $0x8] sm:$0xf]
    %v802 = vld [vmem:[%s1 + $0xc] sm:$0xff]
    %v803 = vld [vmem:[%s1 + $0x14] sm:$0xf]
    %v804 = vld [vmem:[%s1 + $0x18] sm:$0xff]
    %v805 = vld [vmem:[%s1 + $0x20] sm:$0xf]
    %v806 = vld [vmem:[%s1 + $0x24] sm:$0xff]
    %v807 = vld [vmem:[%s1 + $0x2c] sm:$0xf]
    %v808 = vld [vmem:[%s2] sm:$0x7]
    %v810 = vperm.slane %v808, 0
    %v811 = vperm.slane %v808, 1
    %v812 = vperm.slane %v808, 2
    %v824 = vunpack.c.l.b16 %v800
    %v825 = vunpack.c.h.b16 %v800
    %v826 = vunpack.c.l.b16 %v801
    %v827 = vunpack.c.l.b16 %v802
    %v828 = vunpack.c.h.b16 %v802
    %v829 = vunpack.c.l.b16 %v803
    %v830 = vunpack.c.l.b16 %v804
    %v831 = vunpack.c.h.b16 %v804
    %v832 = vunpack.c.l.b16 %v805
    %v833 = vunpack.c.l.b16 %v806
    %v834 = vunpack.c.h.b16 %v806
    %v835 = vunpack.c.l.b16 %v807
    %v836 = vpack.c.b16 %v827, %v824
    %v837 = vpack.c.b16 %v828, %v825
    %v838 = vpack.c.b16 %v829, %v826
    %v839 = vpack.c.b16 %v833, %v830
    %v840 = vpack.c.b16 %v834, %v831
    %v841 = vpack.c.b16 %v835, %v832
    %v849 = vsel %vm72, %v784, 0
    %v852 = vsel %vm72, %v785, 0
    %v855 = vsel %vm72, %v786, 0
    %v858 = vsel %vm72, %v787, 0
    %v861 = vsel %vm72, %v788, 0
    %v864 = vsel %vm72, %v789, 0
    %v867 = vsel %vm72, %v790, 0
    %v870 = vsel %vm72, %v791, 0
    %v873 = vsel %vm72, %v792, 0
    %v876 = vsel %vm72, %v793, 0
    %v879 = vsel %vm72, %v794, 0
    %v882 = vsel %vm72, %v795, 0
    %v885 = vsel %vm72, %v796, 0
    %v888 = vsel %vm72, %v797, 0
    %v891 = vsel %vm72, %v798, 0
    %v894 = vsel %vm72, %v799, 0
    %896 = vmatpush.bf16.msra.mxu0 0
    %897 = vmatpush.bf16.msra.mxu0 0
    %898 = vmatpush.bf16.msra.mxu0 0
    %899 = vmatpush.bf16.msra.mxu0 0
    %900 = vmatpush.bf16.msra.mxu0 0
    %901 = vmatpush.bf16.msra.mxu0 0
    %902 = vmatpush.bf16.msra.mxu0 %v839
    %903 = vmatpush.bf16.msra.mxu0 %v836
    %904 = vmatmul.bf16.gmra.mxu0 %v849
    %v905 = vpop.f32.mrf.mxu0
    %v906 = vadd.f32 %v810, %v905
    %v907 = vpop.f32.mrf.mxu0
    %v908 = vadd.f32 %v810, %v907
    %909 = vmatmul.bf16.gmra.mxu0 %v852
    %v910 = vpop.f32.mrf.mxu0
    %v911 = vadd.f32 %v810, %v910
    %v912 = vpop.f32.mrf.mxu0
    %v913 = vadd.f32 %v810, %v912
    %914 = vmatmul.bf16.gmra.mxu0 %v855
    %v915 = vpop.f32.mrf.mxu0
    %v916 = vadd.f32 %v810, %v915
    %v917 = vpop.f32.mrf.mxu0
    %v918 = vadd.f32 %v810, %v917
    %919 = vmatmul.bf16.gmra.mxu0 %v858
    %v920 = vpop.f32.mrf.mxu0
    %v921 = vadd.f32 %v810, %v920
    %v922 = vpop.f32.mrf.mxu0
    %v923 = vadd.f32 %v810, %v922
    %924 = vmatmul.bf16.gmra.mxu0 %v861
    %v925 = vpop.f32.mrf.mxu0
    %v926 = vadd.f32 %v810, %v925
    %v927 = vpop.f32.mrf.mxu0
    %v928 = vadd.f32 %v810, %v927
    %929 = vmatmul.bf16.gmra.mxu0 %v864
    %v930 = vpop.f32.mrf.mxu0
    %v931 = vadd.f32 %v810, %v930
    %v932 = vpop.f32.mrf.mxu0
    %v933 = vadd.f32 %v810, %v932
    %934 = vmatmul.bf16.gmra.mxu0 %v867
    %v935 = vpop.f32.mrf.mxu0
    %v936 = vadd.f32 %v810, %v935
    %v937 = vpop.f32.mrf.mxu0
    %v938 = vadd.f32 %v810, %v937
    %939 = vmatmul.bf16.gmra.mxu0 %v870
    %v940 = vpop.f32.mrf.mxu0
    %v941 = vadd.f32 %v810, %v940
    %v942 = vpop.f32.mrf.mxu0
    %v943 = vadd.f32 %v810, %v942
    %944 = vmatmul.bf16.gmra.mxu0 %v873
    %v945 = vpop.f32.mrf.mxu0
    %v946 = vadd.f32 %v810, %v945
    %v947 = vpop.f32.mrf.mxu0
    %v948 = vadd.f32 %v810, %v947
    %949 = vmatmul.bf16.gmra.mxu0 %v876
    %v950 = vpop.f32.mrf.mxu0
    %v951 = vadd.f32 %v810, %v950
    %v952 = vpop.f32.mrf.mxu0
    %v953 = vadd.f32 %v810, %v952
    %954 = vmatmul.bf16.gmra.mxu0 %v879
    %v955 = vpop.f32.mrf.mxu0
    %v956 = vadd.f32 %v810, %v955
    %v957 = vpop.f32.mrf.mxu0
    %v958 = vadd.f32 %v810, %v957
    %959 = vmatmul.bf16.gmra.mxu0 %v882
    %v960 = vpop.f32.mrf.mxu0
    %v961 = vadd.f32 %v810, %v960
    %v962 = vpop.f32.mrf.mxu0
    %v963 = vadd.f32 %v810, %v962
    %964 = vmatmul.bf16.gmra.mxu0 %v885
    %v965 = vpop.f32.mrf.mxu0
    %v966 = vadd.f32 %v810, %v965
    %v967 = vpop.f32.mrf.mxu0
    %v968 = vadd.f32 %v810, %v967
    %969 = vmatmul.bf16.gmra.mxu0 %v888
    %v970 = vpop.f32.mrf.mxu0
    %v971 = vadd.f32 %v810, %v970
    %v972 = vpop.f32.mrf.mxu0
    %v973 = vadd.f32 %v810, %v972
    %974 = vmatmul.bf16.gmra.mxu0 %v891
    %v975 = vpop.f32.mrf.mxu0
    %v976 = vadd.f32 %v810, %v975
    %v977 = vpop.f32.mrf.mxu0
    %v978 = vadd.f32 %v810, %v977
    %979 = vmatmul.bf16.gmra.mxu0 %v894
    %v980 = vpop.f32.mrf.mxu0
    %v981 = vadd.f32 %v810, %v980
    %v982 = vpop.f32.mrf.mxu0
    %v983 = vadd.f32 %v810, %v982
    %984 = vdwg.mxu0
    %985 = vmatpush.bf16.msra.mxu0 0
    %986 = vmatpush.bf16.msra.mxu0 0
    %987 = vmatpush.bf16.msra.mxu0 0
    %988 = vmatpush.bf16.msra.mxu0 0
    %989 = vmatpush.bf16.msra.mxu0 0
    %990 = vmatpush.bf16.msra.mxu0 0
    %991 = vmatpush.bf16.msra.mxu0 %v840
    %992 = vmatpush.bf16.msra.mxu0 %v837
    %993 = vmatmul.bf16.gmra.mxu0 %v849
    %v994 = vpop.f32.mrf.mxu0
    %v995 = vadd.f32 %v811, %v994
    %v996 = vpop.f32.mrf.mxu0
    %v997 = vadd.f32 %v811, %v996
    %998 = vmatmul.bf16.gmra.mxu0 %v852
    %v999 = vpop.f32.mrf.mxu0
    %v1000 = vadd.f32 %v811, %v999
    %v1001 = vpop.f32.mrf.mxu0
    %v1002 = vadd.f32 %v811, %v1001
    %1003 = vmatmul.bf16.gmra.mxu0 %v855
    %v1004 = vpop.f32.mrf.mxu0
    %v1005 = vadd.f32 %v811, %v1004
    %v1006 = vpop.f32.mrf.mxu0
    %v1007 = vadd.f32 %v811, %v1006
    %1008 = vmatmul.bf16.gmra.mxu0 %v858
    %v1009 = vpop.f32.mrf.mxu0
    %v1010 = vadd.f32 %v811, %v1009
    %v1011 = vpop.f32.mrf.mxu0
    %v1012 = vadd.f32 %v811, %v1011
    %1013 = vmatmul.bf16.gmra.mxu0 %v861
    %v1014 = vpop.f32.mrf.mxu0
    %v1015 = vadd.f32 %v811, %v1014
    %v1016 = vpop.f32.mrf.mxu0
    %v1017 = vadd.f32 %v811, %v1016
    %1018 = vmatmul.bf16.gmra.mxu0 %v864
    %v1019 = vpop.f32.mrf.mxu0
    %v1020 = vadd.f32 %v811, %v1019
    %v1021 = vpop.f32.mrf.mxu0
    %v1022 = vadd.f32 %v811, %v1021
    %1023 = vmatmul.bf16.gmra.mxu0 %v867
    %v1024 = vpop.f32.mrf.mxu0
    %v1025 = vadd.f32 %v811, %v1024
    %v1026 = vpop.f32.mrf.mxu0
    %v1027 = vadd.f32 %v811, %v1026
    %1028 = vmatmul.bf16.gmra.mxu0 %v870
    %v1029 = vpop.f32.mrf.mxu0
    %v1030 = vadd.f32 %v811, %v1029
    %v1031 = vpop.f32.mrf.mxu0
    %v1032 = vadd.f32 %v811, %v1031
    %1033 = vmatmul.bf16.gmra.mxu0 %v873
    %v1034 = vpop.f32.mrf.mxu0
    %v1035 = vadd.f32 %v811, %v1034
    %v1036 = vpop.f32.mrf.mxu0
    %v1037 = vadd.f32 %v811, %v1036
    %1038 = vmatmul.bf16.gmra.mxu0 %v876
    %v1039 = vpop.f32.mrf.mxu0
    %v1040 = vadd.f32 %v811, %v1039
    %v1041 = vpop.f32.mrf.mxu0
    %v1042 = vadd.f32 %v811, %v1041
    %1043 = vmatmul.bf16.gmra.mxu0 %v879
    %v1044 = vpop.f32.mrf.mxu0
    %v1045 = vadd.f32 %v811, %v1044
    %v1046 = vpop.f32.mrf.mxu0
    %v1047 = vadd.f32 %v811, %v1046
    %1048 = vmatmul.bf16.gmra.mxu0 %v882
    %v1049 = vpop.f32.mrf.mxu0
    %v1050 = vadd.f32 %v811, %v1049
    %v1051 = vpop.f32.mrf.mxu0
    %v1052 = vadd.f32 %v811, %v1051
    %1053 = vmatmul.bf16.gmra.mxu0 %v885
    %v1054 = vpop.f32.mrf.mxu0
    %v1055 = vadd.f32 %v811, %v1054
    %v1056 = vpop.f32.mrf.mxu0
    %v1057 = vadd.f32 %v811, %v1056
    %1058 = vmatmul.bf16.gmra.mxu0 %v888
    %v1059 = vpop.f32.mrf.mxu0
    %v1060 = vadd.f32 %v811, %v1059
    %v1061 = vpop.f32.mrf.mxu0
    %v1062 = vadd.f32 %v811, %v1061
    %1063 = vmatmul.bf16.gmra.mxu0 %v891
    %v1064 = vpop.f32.mrf.mxu0
    %v1065 = vadd.f32 %v811, %v1064
    %v1066 = vpop.f32.mrf.mxu0
    %v1067 = vadd.f32 %v811, %v1066
    %1068 = vmatmul.bf16.gmra.mxu0 %v894
    %v1069 = vpop.f32.mrf.mxu0
    %v1070 = vadd.f32 %v811, %v1069
    %v1071 = vpop.f32.mrf.mxu0
    %v1072 = vadd.f32 %v811, %v1071
    %1073 = vdwg.mxu0
    %1074 = vmatpush.bf16.msra.mxu0 0
    %1075 = vmatpush.bf16.msra.mxu0 0
    %1076 = vmatpush.bf16.msra.mxu0 0
    %1077 = vmatpush.bf16.msra.mxu0 0
    %1078 = vmatpush.bf16.msra.mxu0 0
    %1079 = vmatpush.bf16.msra.mxu0 0
    %1080 = vmatpush.bf16.msra.mxu0 %v841
    %1081 = vmatpush.bf16.msra.mxu0 %v838
    %1082 = vmatmul.bf16.gmra.mxu0 %v849
    %v1083 = vpop.f32.mrf.mxu0
    %v1084 = vadd.f32 %v812, %v1083
    %v1085 = vpop.f32.mrf.mxu0
    %v1086 = vadd.f32 %v812, %v1085
    %1087 = vmatmul.bf16.gmra.mxu0 %v852
    %v1088 = vpop.f32.mrf.mxu0
    %v1089 = vadd.f32 %v812, %v1088
    %v1090 = vpop.f32.mrf.mxu0
    %v1091 = vadd.f32 %v812, %v1090
    %1092 = vmatmul.bf16.gmra.mxu0 %v855
    %v1093 = vpop.f32.mrf.mxu0
    %v1094 = vadd.f32 %v812, %v1093
    %v1095 = vpop.f32.mrf.mxu0
    %v1096 = vadd.f32 %v812, %v1095
    %1097 = vmatmul.bf16.gmra.mxu0 %v858
    %v1098 = vpop.f32.mrf.mxu0
    %v1099 = vadd.f32 %v812, %v1098
    %v1100 = vpop.f32.mrf.mxu0
    %v1101 = vadd.f32 %v812, %v1100
    %1102 = vmatmul.bf16.gmra.mxu0 %v861
    %v1103 = vpop.f32.mrf.mxu0
    %v1104 = vadd.f32 %v812, %v1103
    %v1105 = vpop.f32.mrf.mxu0
    %v1106 = vadd.f32 %v812, %v1105
    %1107 = vmatmul.bf16.gmra.mxu0 %v864
    %v1108 = vpop.f32.mrf.mxu0
    %v1109 = vadd.f32 %v812, %v1108
    %v1110 = vpop.f32.mrf.mxu0
    %v1111 = vadd.f32 %v812, %v1110
    %1112 = vmatmul.bf16.gmra.mxu0 %v867
    %v1113 = vpop.f32.mrf.mxu0
    %v1114 = vadd.f32 %v812, %v1113
    %v1115 = vpop.f32.mrf.mxu0
    %v1116 = vadd.f32 %v812, %v1115
    %1117 = vmatmul.bf16.gmra.mxu0 %v870
    %v1118 = vpop.f32.mrf.mxu0
    %v1119 = vadd.f32 %v812, %v1118
    %v1120 = vpop.f32.mrf.mxu0
    %v1121 = vadd.f32 %v812, %v1120
    %1122 = vmatmul.bf16.gmra.mxu0 %v873
    %v1123 = vpop.f32.mrf.mxu0
    %v1124 = vadd.f32 %v812, %v1123
    %v1125 = vpop.f32.mrf.mxu0
    %v1126 = vadd.f32 %v812, %v1125
    %1127 = vmatmul.bf16.gmra.mxu0 %v876
    %v1128 = vpop.f32.mrf.mxu0
    %v1129 = vadd.f32 %v812, %v1128
    %v1130 = vpop.f32.mrf.mxu0
    %v1131 = vadd.f32 %v812, %v1130
    %1132 = vmatmul.bf16.gmra.mxu0 %v879
    %v1133 = vpop.f32.mrf.mxu0
    %v1134 = vadd.f32 %v812, %v1133
    %v1135 = vpop.f32.mrf.mxu0
    %v1136 = vadd.f32 %v812, %v1135
    %1137 = vmatmul.bf16.gmra.mxu0 %v882
    %v1138 = vpop.f32.mrf.mxu0
    %v1139 = vadd.f32 %v812, %v1138
    %v1140 = vpop.f32.mrf.mxu0
    %v1141 = vadd.f32 %v812, %v1140
    %1142 = vmatmul.bf16.gmra.mxu0 %v885
    %v1143 = vpop.f32.mrf.mxu0
    %v1144 = vadd.f32 %v812, %v1143
    %v1145 = vpop.f32.mrf.mxu0
    %v1146 = vadd.f32 %v812, %v1145
    %1147 = vmatmul.bf16.gmra.mxu0 %v888
    %v1148 = vpop.f32.mrf.mxu0
    %v1149 = vadd.f32 %v812, %v1148
    %v1150 = vpop.f32.mrf.mxu0
    %v1151 = vadd.f32 %v812, %v1150
    %1152 = vmatmul.bf16.gmra.mxu0 %v891
    %v1153 = vpop.f32.mrf.mxu0
    %v1154 = vadd.f32 %v812, %v1153
    %v1155 = vpop.f32.mrf.mxu0
    %v1156 = vadd.f32 %v812, %v1155
    %1157 = vmatmul.bf16.gmra.mxu0 %v894
    %v1158 = vpop.f32.mrf.mxu0
    %v1159 = vadd.f32 %v812, %v1158
    %v1160 = vpop.f32.mrf.mxu0
    %v1161 = vadd.f32 %v812, %v1160
    %1162 = vdwg.mxu0
    %v1163 = vpack.c.bf16 %v908, %v906
    %v1164 = vpack.c.bf16 %v913, %v911
    %v1165 = vpack.c.bf16 %v918, %v916
    %v1166 = vpack.c.bf16 %v923, %v921
    %v1167 = vpack.c.bf16 %v928, %v926
    %v1168 = vpack.c.bf16 %v933, %v931
    %v1169 = vpack.c.bf16 %v938, %v936
    %v1170 = vpack.c.bf16 %v943, %v941
    %v1171 = vpack.c.bf16 %v948, %v946
    %v1172 = vpack.c.bf16 %v953, %v951
    %v1173 = vpack.c.bf16 %v958, %v956
    %v1174 = vpack.c.bf16 %v963, %v961
    %v1175 = vpack.c.bf16 %v968, %v966
    %v1176 = vpack.c.bf16 %v973, %v971
    %v1177 = vpack.c.bf16 %v978, %v976
    %v1178 = vpack.c.bf16 %v983, %v981
    %v1179 = vpack.c.bf16 %v997, %v995
    %v1180 = vpack.c.bf16 %v1002, %v1000
    %v1181 = vpack.c.bf16 %v1007, %v1005
    %v1182 = vpack.c.bf16 %v1012, %v1010
    %v1183 = vpack.c.bf16 %v1017, %v1015
    %v1184 = vpack.c.bf16 %v1022, %v1020
    %v1185 = vpack.c.bf16 %v1027, %v1025
    %v1186 = vpack.c.bf16 %v1032, %v1030
    %v1187 = vpack.c.bf16 %v1037, %v1035
    %v1188 = vpack.c.bf16 %v1042, %v1040
    %v1189 = vpack.c.bf16 %v1047, %v1045
    %v1190 = vpack.c.bf16 %v1052, %v1050
    %v1191 = vpack.c.bf16 %v1057, %v1055
    %v1192 = vpack.c.bf16 %v1062, %v1060
    %v1193 = vpack.c.bf16 %v1067, %v1065
    %v1194 = vpack.c.bf16 %v1072, %v1070
    %v1195 = vld [vmem:[#allocation2] sm:$0xff]
    %v1196 = vld [vmem:[#allocation2 + $0x8] sm:$0xff]
    %v1197 = vld [vmem:[#allocation2 + $0x10] sm:$0xff]
    %v1198 = vld [vmem:[#allocation2 + $0x18] sm:$0xff]
    %v1199 = vld [vmem:[#allocation2 + $0x20] sm:$0xff]
    %v1200 = vld [vmem:[#allocation2 + $0x28] sm:$0xff]
    %v1201 = vld [vmem:[#allocation2 + $0x30] sm:$0xff]
    %v1202 = vld [vmem:[#allocation2 + $0x38] sm:$0xff]
    %v1203 = vld [vmem:[#allocation2 + $0x40] sm:$0xff]
    %v1204 = vld [vmem:[#allocation2 + $0x48] sm:$0xff]
    %v1205 = vld [vmem:[#allocation2 + $0x50] sm:$0xff]
    %v1206 = vld [vmem:[#allocation2 + $0x58] sm:$0xff]
    %v1207 = vld [vmem:[#allocation2 + $0x60] sm:$0xff]
    %v1208 = vld [vmem:[#allocation2 + $0x68] sm:$0xff]
    %v1209 = vld [vmem:[#allocation2 + $0x70] sm:$0xff]
    %v1210 = vld [vmem:[#allocation2 + $0x78] sm:$0xff]
    %v1211 = vld [vmem:[#allocation2 + $0x80] sm:$0xff]
    %v1212 = vld [vmem:[#allocation2 + $0x88] sm:$0xff]
    %v1213 = vld [vmem:[#allocation2 + $0x90] sm:$0xff]
    %v1214 = vld [vmem:[#allocation2 + $0x98] sm:$0xff]
    %v1215 = vld [vmem:[#allocation2 + $0xa0] sm:$0xff]
    %v1216 = vld [vmem:[#allocation2 + $0xa8] sm:$0xff]
    %v1217 = vld [vmem:[#allocation2 + $0xb0] sm:$0xff]
    %v1218 = vld [vmem:[#allocation2 + $0xb8] sm:$0xff]
    %v1219 = vld [vmem:[#allocation2 + $0xc0] sm:$0xff]
    %v1220 = vld [vmem:[#allocation2 + $0xc8] sm:$0xff]
    %v1221 = vld [vmem:[#allocation2 + $0xd0] sm:$0xff]
    %v1222 = vld [vmem:[#allocation2 + $0xd8] sm:$0xff]
    %v1223 = vld [vmem:[#allocation2 + $0xe0] sm:$0xff]
    %v1224 = vld [vmem:[#allocation2 + $0xe8] sm:$0xff]
    %v1225 = vld [vmem:[#allocation2 + $0xf0] sm:$0xff]
    %v1226 = vld [vmem:[#allocation2 + $0xf8] sm:$0xff]
    %v1227 = vld [vmem:[#allocation2 + $0x100] sm:$0xff]
    %v1228 = vld [vmem:[#allocation2 + $0x108] sm:$0xff]
    %v1229 = vld [vmem:[#allocation2 + $0x110] sm:$0xff]
    %v1230 = vld [vmem:[#allocation2 + $0x118] sm:$0xff]
    %v1231 = vld [vmem:[#allocation2 + $0x120] sm:$0xff]
    %v1232 = vld [vmem:[#allocation2 + $0x128] sm:$0xff]
    %v1233 = vld [vmem:[#allocation2 + $0x130] sm:$0xff]
    %v1234 = vld [vmem:[#allocation2 + $0x138] sm:$0xff]
    %v1235 = vld [vmem:[#allocation2 + $0x140] sm:$0xff]
    %v1236 = vld [vmem:[#allocation2 + $0x148] sm:$0xff]
    %v1237 = vld [vmem:[#allocation2 + $0x150] sm:$0xff]
    %v1238 = vld [vmem:[#allocation2 + $0x158] sm:$0xff]
    %v1239 = vld [vmem:[#allocation2 + $0x160] sm:$0xff]
    %v1240 = vld [vmem:[#allocation2 + $0x168] sm:$0xff]
    %v1241 = vld [vmem:[#allocation2 + $0x170] sm:$0xff]
    %v1242 = vld [vmem:[#allocation2 + $0x178] sm:$0xff]
    %v1243 = vld [vmem:[#allocation2 + $0x180] sm:$0xff]
    %v1244 = vld [vmem:[#allocation2 + $0x188] sm:$0xff]
    %v1245 = vld [vmem:[#allocation2 + $0x190] sm:$0xff]
    %v1246 = vld [vmem:[#allocation2 + $0x198] sm:$0xff]
    %v1247 = vld [vmem:[#allocation2 + $0x1a0] sm:$0xff]
    %v1248 = vld [vmem:[#allocation2 + $0x1a8] sm:$0xff]
    %v1249 = vld [vmem:[#allocation2 + $0x1b0] sm:$0xff]
    %v1250 = vld [vmem:[#allocation2 + $0x1b8] sm:$0xff]
    %v1251 = vld [vmem:[#allocation2 + $0x1c0] sm:$0xff]
    %v1252 = vld [vmem:[#allocation2 + $0x1c8] sm:$0xff]
    %v1253 = vld [vmem:[#allocation2 + $0x1d0] sm:$0xff]
    %v1254 = vld [vmem:[#allocation2 + $0x1d8] sm:$0xff]
    %v1255 = vld [vmem:[#allocation2 + $0x1e0] sm:$0xff]
    %v1256 = vld [vmem:[#allocation2 + $0x1e8] sm:$0xff]
    %v1257 = vld [vmem:[#allocation2 + $0x1f0] sm:$0xff]
    %v1258 = vld [vmem:[#allocation2 + $0x1f8] sm:$0xff]
    %1259 = vmatpush.bf16.xpose.msra.mxu0 %v1186
    %1260 = vmatpush.bf16.xpose.msra.mxu0 %v1185
    %1261 = vmatpush.bf16.xpose.msra.mxu0 %v1184
    %1262 = vmatpush.bf16.xpose.msra.mxu0 %v1183
    %1263 = vmatpush.bf16.xpose.msra.mxu0 %v1182
    %1264 = vmatpush.bf16.xpose.msra.mxu0 %v1181
    %1265 = vmatpush.bf16.xpose.msra.mxu0 %v1180
    %1266 = vmatpush.bf16.xpose.msra.mxu0 %v1179
    %1267 = vmatmul.bf16.gmra.mxu0 %v1163
    %v1268 = vpop.f32.mrf.mxu0
    %v1269 = vadd.f32 %v1195, %v1268
    %v1270 = vpop.f32.mrf.mxu0
    %v1271 = vadd.f32 %v1197, %v1270
    %1272 = vmatmul.bf16.gmra.mxu0 %v1164
    %v1273 = vpop.f32.mrf.mxu0
    %v1274 = vadd.f32 %v1199, %v1273
    %v1275 = vpop.f32.mrf.mxu0
    %v1276 = vadd.f32 %v1201, %v1275
    %1277 = vmatmul.bf16.gmra.mxu0 %v1165
    %v1278 = vpop.f32.mrf.mxu0
    %v1279 = vadd.f32 %v1203, %v1278
    %v1280 = vpop.f32.mrf.mxu0
    %v1281 = vadd.f32 %v1205, %v1280
    %1282 = vmatmul.bf16.gmra.mxu0 %v1166
    %v1283 = vpop.f32.mrf.mxu0
    %v1284 = vadd.f32 %v1207, %v1283
    %v1285 = vpop.f32.mrf.mxu0
    %v1286 = vadd.f32 %v1209, %v1285
    %1287 = vmatmul.bf16.gmra.mxu0 %v1167
    %v1288 = vpop.f32.mrf.mxu0
    %v1289 = vadd.f32 %v1211, %v1288
    %v1290 = vpop.f32.mrf.mxu0
    %v1291 = vadd.f32 %v1213, %v1290
    %1292 = vmatmul.bf16.gmra.mxu0 %v1168
    %v1293 = vpop.f32.mrf.mxu0
    %v1294 = vadd.f32 %v1215, %v1293
    %v1295 = vpop.f32.mrf.mxu0
    %v1296 = vadd.f32 %v1217, %v1295
    %1297 = vmatmul.bf16.gmra.mxu0 %v1169
    %v1298 = vpop.f32.mrf.mxu0
    %v1299 = vadd.f32 %v1219, %v1298
    %v1300 = vpop.f32.mrf.mxu0
    %v1301 = vadd.f32 %v1221, %v1300
    %1302 = vmatmul.bf16.gmra.mxu0 %v1170
    %v1303 = vpop.f32.mrf.mxu0
    %v1304 = vadd.f32 %v1223, %v1303
    %v1305 = vpop.f32.mrf.mxu0
    %v1306 = vadd.f32 %v1225, %v1305
    %1307 = vmatmul.bf16.gmra.mxu0 %v1171
    %v1308 = vpop.f32.mrf.mxu0
    %v1309 = vadd.f32 %v1227, %v1308
    %v1310 = vpop.f32.mrf.mxu0
    %v1311 = vadd.f32 %v1229, %v1310
    %1312 = vmatmul.bf16.gmra.mxu0 %v1172
    %v1313 = vpop.f32.mrf.mxu0
    %v1314 = vadd.f32 %v1231, %v1313
    %v1315 = vpop.f32.mrf.mxu0
    %v1316 = vadd.f32 %v1233, %v1315
    %1317 = vmatmul.bf16.gmra.mxu0 %v1173
    %v1318 = vpop.f32.mrf.mxu0
    %v1319 = vadd.f32 %v1235, %v1318
    %v1320 = vpop.f32.mrf.mxu0
    %v1321 = vadd.f32 %v1237, %v1320
    %1322 = vmatmul.bf16.gmra.mxu0 %v1174
    %v1323 = vpop.f32.mrf.mxu0
    %v1324 = vadd.f32 %v1239, %v1323
    %v1325 = vpop.f32.mrf.mxu0
    %v1326 = vadd.f32 %v1241, %v1325
    %1327 = vmatmul.bf16.gmra.mxu0 %v1175
    %v1328 = vpop.f32.mrf.mxu0
    %v1329 = vadd.f32 %v1243, %v1328
    %v1330 = vpop.f32.mrf.mxu0
    %v1331 = vadd.f32 %v1245, %v1330
    %1332 = vmatmul.bf16.gmra.mxu0 %v1176
    %v1333 = vpop.f32.mrf.mxu0
    %v1334 = vadd.f32 %v1247, %v1333
    %v1335 = vpop.f32.mrf.mxu0
    %v1336 = vadd.f32 %v1249, %v1335
    %1337 = vmatmul.bf16.gmra.mxu0 %v1177
    %v1338 = vpop.f32.mrf.mxu0
    %v1339 = vadd.f32 %v1251, %v1338
    %v1340 = vpop.f32.mrf.mxu0
    %v1341 = vadd.f32 %v1253, %v1340
    %1342 = vmatmul.bf16.gmra.mxu0 %v1178
    %v1343 = vpop.f32.mrf.mxu0
    %v1344 = vadd.f32 %v1255, %v1343
    %v1345 = vpop.f32.mrf.mxu0
    %v1346 = vadd.f32 %v1257, %v1345
    %1347 = vdwg.mxu0
    %1348 = vmatpush.bf16.xpose.msra.mxu0 %v1194
    %1349 = vmatpush.bf16.xpose.msra.mxu0 %v1193
    %1350 = vmatpush.bf16.xpose.msra.mxu0 %v1192
    %1351 = vmatpush.bf16.xpose.msra.mxu0 %v1191
    %1352 = vmatpush.bf16.xpose.msra.mxu0 %v1190
    %1353 = vmatpush.bf16.xpose.msra.mxu0 %v1189
    %1354 = vmatpush.bf16.xpose.msra.mxu0 %v1188
    %1355 = vmatpush.bf16.xpose.msra.mxu0 %v1187
    %1356 = vmatmul.bf16.gmra.mxu0 %v1163
    %v1357 = vpop.f32.mrf.mxu0
    %v1358 = vadd.f32 %v1196, %v1357
    %v1359 = vpop.f32.mrf.mxu0
    %v1360 = vadd.f32 %v1198, %v1359
    %1361 = vmatmul.bf16.gmra.mxu0 %v1164
    %v1362 = vpop.f32.mrf.mxu0
    %v1363 = vadd.f32 %v1200, %v1362
    %v1364 = vpop.f32.mrf.mxu0
    %v1365 = vadd.f32 %v1202, %v1364
    %1366 = vmatmul.bf16.gmra.mxu0 %v1165
    %v1367 = vpop.f32.mrf.mxu0
    %v1368 = vadd.f32 %v1204, %v1367
    %v1369 = vpop.f32.mrf.mxu0
    %v1370 = vadd.f32 %v1206, %v1369
    %1371 = vmatmul.bf16.gmra.mxu0 %v1166
    %v1372 = vpop.f32.mrf.mxu0
    %v1373 = vadd.f32 %v1208, %v1372
    %v1374 = vpop.f32.mrf.mxu0
    %v1375 = vadd.f32 %v1210, %v1374
    %1376 = vmatmul.bf16.gmra.mxu0 %v1167
    %v1377 = vpop.f32.mrf.mxu0
    %v1378 = vadd.f32 %v1212, %v1377
    %v1379 = vpop.f32.mrf.mxu0
    %v1380 = vadd.f32 %v1214, %v1379
    %1381 = vmatmul.bf16.gmra.mxu0 %v1168
    %v1382 = vpop.f32.mrf.mxu0
    %v1383 = vadd.f32 %v1216, %v1382
    %v1384 = vpop.f32.mrf.mxu0
    %v1385 = vadd.f32 %v1218, %v1384
    %1386 = vmatmul.bf16.gmra.mxu0 %v1169
    %v1387 = vpop.f32.mrf.mxu0
    %v1388 = vadd.f32 %v1220, %v1387
    %v1389 = vpop.f32.mrf.mxu0
    %v1390 = vadd.f32 %v1222, %v1389
    %1391 = vmatmul.bf16.gmra.mxu0 %v1170
    %v1392 = vpop.f32.mrf.mxu0
    %v1393 = vadd.f32 %v1224, %v1392
    %v1394 = vpop.f32.mrf.mxu0
    %v1395 = vadd.f32 %v1226, %v1394
    %1396 = vmatmul.bf16.gmra.mxu0 %v1171
    %v1397 = vpop.f32.mrf.mxu0
    %v1398 = vadd.f32 %v1228, %v1397
    %v1399 = vpop.f32.mrf.mxu0
    %v1400 = vadd.f32 %v1230, %v1399
    %1401 = vmatmul.bf16.gmra.mxu0 %v1172
    %v1402 = vpop.f32.mrf.mxu0
    %v1403 = vadd.f32 %v1232, %v1402
    %v1404 = vpop.f32.mrf.mxu0
    %v1405 = vadd.f32 %v1234, %v1404
    %1406 = vmatmul.bf16.gmra.mxu0 %v1173
    %v1407 = vpop.f32.mrf.mxu0
    %v1408 = vadd.f32 %v1236, %v1407
    %v1409 = vpop.f32.mrf.mxu0
    %v1410 = vadd.f32 %v1238, %v1409
    %1411 = vmatmul.bf16.gmra.mxu0 %v1174
    %v1412 = vpop.f32.mrf.mxu0
    %v1413 = vadd.f32 %v1240, %v1412
    %v1414 = vpop.f32.mrf.mxu0
    %v1415 = vadd.f32 %v1242, %v1414
    %1416 = vmatmul.bf16.gmra.mxu0 %v1175
    %v1417 = vpop.f32.mrf.mxu0
    %v1418 = vadd.f32 %v1244, %v1417
    %v1419 = vpop.f32.mrf.mxu0
    %v1420 = vadd.f32 %v1246, %v1419
    %1421 = vmatmul.bf16.gmra.mxu0 %v1176
    %v1422 = vpop.f32.mrf.mxu0
    %v1423 = vadd.f32 %v1248, %v1422
    %v1424 = vpop.f32.mrf.mxu0
    %v1425 = vadd.f32 %v1250, %v1424
    %1426 = vmatmul.bf16.gmra.mxu0 %v1177
    %v1427 = vpop.f32.mrf.mxu0
    %v1428 = vadd.f32 %v1252, %v1427
    %v1429 = vpop.f32.mrf.mxu0
    %v1430 = vadd.f32 %v1254, %v1429
    %1431 = vmatmul.bf16.gmra.mxu0 %v1178
    %v1432 = vpop.f32.mrf.mxu0
    %v1433 = vadd.f32 %v1256, %v1432
    %v1434 = vpop.f32.mrf.mxu0
    %v1435 = vadd.f32 %v1258, %v1434
    %1436 = vdwg.mxu0
    %v1437 = vmax.f32 %v1269, %v1358
    %1438 = vmax.xlane.f32.xlu0 %v1437
    %v1439 = vpop.xlane.xlu0 %1438
    %v1440 = vmax.f32 %v1271, %v1360
    %1441 = vmax.xlane.f32.xlu0 %v1440
    %v1442 = vpop.xlane.xlu0 %1441
    %v1443 = vmax.f32 %v1274, %v1363
    %1444 = vmax.xlane.f32.xlu0 %v1443
    %v1445 = vpop.xlane.xlu0 %1444
    %v1446 = vmax.f32 %v1276, %v1365
    %1447 = vmax.xlane.f32.xlu0 %v1446
    %v1448 = vpop.xlane.xlu0 %1447
    %v1449 = vmax.f32 %v1279, %v1368
    %1450 = vmax.xlane.f32.xlu0 %v1449
    %v1451 = vpop.xlane.xlu0 %1450
    %v1452 = vmax.f32 %v1281, %v1370
    %1453 = vmax.xlane.f32.xlu0 %v1452
    %v1454 = vpop.xlane.xlu0 %1453
    %v1455 = vmax.f32 %v1284, %v1373
    %1456 = vmax.xlane.f32.xlu0 %v1455
    %v1457 = vpop.xlane.xlu0 %1456
    %v1458 = vmax.f32 %v1286, %v1375
    %1459 = vmax.xlane.f32.xlu0 %v1458
    %v1460 = vpop.xlane.xlu0 %1459
    %v1461 = vmax.f32 %v1289, %v1378
    %1462 = vmax.xlane.f32.xlu0 %v1461
    %v1463 = vpop.xlane.xlu0 %1462
    %v1464 = vmax.f32 %v1291, %v1380
    %1465 = vmax.xlane.f32.xlu0 %v1464
    %v1466 = vpop.xlane.xlu0 %1465
    %v1467 = vmax.f32 %v1294, %v1383
    %1468 = vmax.xlane.f32.xlu0 %v1467
    %v1469 = vpop.xlane.xlu0 %1468
    %v1470 = vmax.f32 %v1296, %v1385
    %1471 = vmax.xlane.f32.xlu0 %v1470
    %v1472 = vpop.xlane.xlu0 %1471
    %v1473 = vmax.f32 %v1299, %v1388
    %1474 = vmax.xlane.f32.xlu0 %v1473
    %v1475 = vpop.xlane.xlu0 %1474
    %v1476 = vmax.f32 %v1301, %v1390
    %1477 = vmax.xlane.f32.xlu0 %v1476
    %v1478 = vpop.xlane.xlu0 %1477
    %v1479 = vmax.f32 %v1304, %v1393
    %1480 = vmax.xlane.f32.xlu0 %v1479
    %v1481 = vpop.xlane.xlu0 %1480
    %v1482 = vmax.f32 %v1306, %v1395
    %1483 = vmax.xlane.f32.xlu0 %v1482
    %v1484 = vpop.xlane.xlu0 %1483
    %v1485 = vmax.f32 %v1309, %v1398
    %1486 = vmax.xlane.f32.xlu0 %v1485
    %v1487 = vpop.xlane.xlu0 %1486
    %v1488 = vmax.f32 %v1311, %v1400
    %1489 = vmax.xlane.f32.xlu0 %v1488
    %v1490 = vpop.xlane.xlu0 %1489
    %v1491 = vmax.f32 %v1314, %v1403
    %1492 = vmax.xlane.f32.xlu0 %v1491
    %v1493 = vpop.xlane.xlu0 %1492
    %v1494 = vmax.f32 %v1316, %v1405
    %1495 = vmax.xlane.f32.xlu0 %v1494
    %v1496 = vpop.xlane.xlu0 %1495
    %v1497 = vmax.f32 %v1319, %v1408
    %1498 = vmax.xlane.f32.xlu0 %v1497
    %v1499 = vpop.xlane.xlu0 %1498
    %v1500 = vmax.f32 %v1321, %v1410
    %1501 = vmax.xlane.f32.xlu0 %v1500
    %v1502 = vpop.xlane.xlu0 %1501
    %v1503 = vmax.f32 %v1324, %v1413
    %1504 = vmax.xlane.f32.xlu0 %v1503
    %v1505 = vpop.xlane.xlu0 %1504
    %v1506 = vmax.f32 %v1326, %v1415
    %1507 = vmax.xlane.f32.xlu0 %v1506
    %v1508 = vpop.xlane.xlu0 %1507
    %v1509 = vmax.f32 %v1329, %v1418
    %1510 = vmax.xlane.f32.xlu0 %v1509
    %v1511 = vpop.xlane.xlu0 %1510
    %v1512 = vmax.f32 %v1331, %v1420
    %1513 = vmax.xlane.f32.xlu0 %v1512
    %v1514 = vpop.xlane.xlu0 %1513
    %v1515 = vmax.f32 %v1334, %v1423
    %1516 = vmax.xlane.f32.xlu0 %v1515
    %v1517 = vpop.xlane.xlu0 %1516
    %v1518 = vmax.f32 %v1336, %v1425
    %1519 = vmax.xlane.f32.xlu0 %v1518
    %v1520 = vpop.xlane.xlu0 %1519
    %v1521 = vmax.f32 %v1339, %v1428
    %1522 = vmax.xlane.f32.xlu0 %v1521
    %v1523 = vpop.xlane.xlu0 %1522
    %v1524 = vmax.f32 %v1341, %v1430
    %1525 = vmax.xlane.f32.xlu0 %v1524
    %v1526 = vpop.xlane.xlu0 %1525
    %v1527 = vmax.f32 %v1344, %v1433
    %1528 = vmax.xlane.f32.xlu0 %v1527
    %v1529 = vpop.xlane.xlu0 %1528
    %v1530 = vmax.f32 %v1346, %v1435
    %1531 = vmax.xlane.f32.xlu0 %v1530
    %v1532 = vpop.xlane.xlu0 %1531
    %v1533 = vsub.f32 %v1269, %v1439
    %v1534 = vsub.f32 %v1358, %v1439
    %v1535 = vsub.f32 %v1271, %v1442
    %v1536 = vsub.f32 %v1360, %v1442
    %v1537 = vsub.f32 %v1274, %v1445
    %v1538 = vsub.f32 %v1363, %v1445
    %v1539 = vsub.f32 %v1276, %v1448
    %v1540 = vsub.f32 %v1365, %v1448
    %v1541 = vsub.f32 %v1279, %v1451
    %v1542 = vsub.f32 %v1368, %v1451
    %v1543 = vsub.f32 %v1281, %v1454
    %v1544 = vsub.f32 %v1370, %v1454
    %v1545 = vsub.f32 %v1284, %v1457
    %v1546 = vsub.f32 %v1373, %v1457
    %v1547 = vsub.f32 %v1286, %v1460
    %v1548 = vsub.f32 %v1375, %v1460
    %v1549 = vsub.f32 %v1289, %v1463
    %v1550 = vsub.f32 %v1378, %v1463
    %v1551 = vsub.f32 %v1291, %v1466
    %v1552 = vsub.f32 %v1380, %v1466
    %v1553 = vsub.f32 %v1294, %v1469
    %v1554 = vsub.f32 %v1383, %v1469
    %v1555 = vsub.f32 %v1296, %v1472
    %v1556 = vsub.f32 %v1385, %v1472
    %v1557 = vsub.f32 %v1299, %v1475
    %v1558 = vsub.f32 %v1388, %v1475
    %v1559 = vsub.f32 %v1301, %v1478
    %v1560 = vsub.f32 %v1390, %v1478
    %v1561 = vsub.f32 %v1304, %v1481
    %v1562 = vsub.f32 %v1393, %v1481
    %v1563 = vsub.f32 %v1306, %v1484
    %v1564 = vsub.f32 %v1395, %v1484
    %v1565 = vsub.f32 %v1309, %v1487
    %v1566 = vsub.f32 %v1398, %v1487
    %v1567 = vsub.f32 %v1311, %v1490
    %v1568 = vsub.f32 %v1400, %v1490
    %v1569 = vsub.f32 %v1314, %v1493
    %v1570 = vsub.f32 %v1403, %v1493
    %v1571 = vsub.f32 %v1316, %v1496
    %v1572 = vsub.f32 %v1405, %v1496
    %v1573 = vsub.f32 %v1319, %v1499
    %v1574 = vsub.f32 %v1408, %v1499
    %v1575 = vsub.f32 %v1321, %v1502
    %v1576 = vsub.f32 %v1410, %v1502
    %v1577 = vsub.f32 %v1324, %v1505
    %v1578 = vsub.f32 %v1413, %v1505
    %v1579 = vsub.f32 %v1326, %v1508
    %v1580 = vsub.f32 %v1415, %v1508
    %v1581 = vsub.f32 %v1329, %v1511
    %v1582 = vsub.f32 %v1418, %v1511
    %v1583 = vsub.f32 %v1331, %v1514
    %v1584 = vsub.f32 %v1420, %v1514
    %v1585 = vsub.f32 %v1334, %v1517
    %v1586 = vsub.f32 %v1423, %v1517
    %v1587 = vsub.f32 %v1336, %v1520
    %v1588 = vsub.f32 %v1425, %v1520
    %v1589 = vsub.f32 %v1339, %v1523
    %v1590 = vsub.f32 %v1428, %v1523
    %v1591 = vsub.f32 %v1341, %v1526
    %v1592 = vsub.f32 %v1430, %v1526
    %v1593 = vsub.f32 %v1344, %v1529
    %v1594 = vsub.f32 %v1433, %v1529
    %v1595 = vsub.f32 %v1346, %v1532
    %v1596 = vsub.f32 %v1435, %v1532
    %v1597 = vmul.f32 %v1533, 1.442695
    %v1598 = vpow.pop %v1597
    %v1599 = vmul.f32 %v1534, 1.442695
    %v1600 = vpow.pop %v1599
    %v1601 = vmul.f32 %v1535, 1.442695
    %v1602 = vpow.pop %v1601
    %v1603 = vmul.f32 %v1536, 1.442695
    %v1604 = vpow.pop %v1603
    %v1605 = vmul.f32 %v1537, 1.442695
    %v1606 = vpow.pop %v1605
    %v1607 = vmul.f32 %v1538, 1.442695
    %v1608 = vpow.pop %v1607
    %v1609 = vmul.f32 %v1539, 1.442695
    %v1610 = vpow.pop %v1609
    %v1611 = vmul.f32 %v1540, 1.442695
    %v1612 = vpow.pop %v1611
    %v1613 = vmul.f32 %v1541, 1.442695
    %v1614 = vpow.pop %v1613
    %v1615 = vmul.f32 %v1542, 1.442695
    %v1616 = vpow.pop %v1615
    %v1617 = vmul.f32 %v1543, 1.442695
    %v1618 = vpow.pop %v1617
    %v1619 = vmul.f32 %v1544, 1.442695
    %v1620 = vpow.pop %v1619
    %v1621 = vmul.f32 %v1545, 1.442695
    %v1622 = vpow.pop %v1621
    %v1623 = vmul.f32 %v1546, 1.442695
    %v1624 = vpow.pop %v1623
    %v1625 = vmul.f32 %v1547, 1.442695
    %v1626 = vpow.pop %v1625
    %v1627 = vmul.f32 %v1548, 1.442695
    %v1628 = vpow.pop %v1627
    %v1629 = vmul.f32 %v1549, 1.442695
    %v1630 = vpow.pop %v1629
    %v1631 = vmul.f32 %v1550, 1.442695
    %v1632 = vpow.pop %v1631
    %v1633 = vmul.f32 %v1551, 1.442695
    %v1634 = vpow.pop %v1633
    %v1635 = vmul.f32 %v1552, 1.442695
    %v1636 = vpow.pop %v1635
    %v1637 = vmul.f32 %v1553, 1.442695
    %v1638 = vpow.pop %v1637
    %v1639 = vmul.f32 %v1554, 1.442695
    %v1640 = vpow.pop %v1639
    %v1641 = vmul.f32 %v1555, 1.442695
    %v1642 = vpow.pop %v1641
    %v1643 = vmul.f32 %v1556, 1.442695
    %v1644 = vpow.pop %v1643
    %v1645 = vmul.f32 %v1557, 1.442695
    %v1646 = vpow.pop %v1645
    %v1647 = vmul.f32 %v1558, 1.442695
    %v1648 = vpow.pop %v1647
    %v1649 = vmul.f32 %v1559, 1.442695
    %v1650 = vpow.pop %v1649
    %v1651 = vmul.f32 %v1560, 1.442695
    %v1652 = vpow.pop %v1651
    %v1653 = vmul.f32 %v1561, 1.442695
    %v1654 = vpow.pop %v1653
    %v1655 = vmul.f32 %v1562, 1.442695
    %v1656 = vpow.pop %v1655
    %v1657 = vmul.f32 %v1563, 1.442695
    %v1658 = vpow.pop %v1657
    %v1659 = vmul.f32 %v1564, 1.442695
    %v1660 = vpow.pop %v1659
    %v1661 = vmul.f32 %v1565, 1.442695
    %v1662 = vpow.pop %v1661
    %v1663 = vmul.f32 %v1566, 1.442695
    %v1664 = vpow.pop %v1663
    %v1665 = vmul.f32 %v1567, 1.442695
    %v1666 = vpow.pop %v1665
    %v1667 = vmul.f32 %v1568, 1.442695
    %v1668 = vpow.pop %v1667
    %v1669 = vmul.f32 %v1569, 1.442695
    %v1670 = vpow.pop %v1669
    %v1671 = vmul.f32 %v1570, 1.442695
    %v1672 = vpow.pop %v1671
    %v1673 = vmul.f32 %v1571, 1.442695
    %v1674 = vpow.pop %v1673
    %v1675 = vmul.f32 %v1572, 1.442695
    %v1676 = vpow.pop %v1675
    %v1677 = vmul.f32 %v1573, 1.442695
    %v1678 = vpow.pop %v1677
    %v1679 = vmul.f32 %v1574, 1.442695
    %v1680 = vpow.pop %v1679
    %v1681 = vmul.f32 %v1575, 1.442695
    %v1682 = vpow.pop %v1681
    %v1683 = vmul.f32 %v1576, 1.442695
    %v1684 = vpow.pop %v1683
    %v1685 = vmul.f32 %v1577, 1.442695
    %v1686 = vpow.pop %v1685
    %v1687 = vmul.f32 %v1578, 1.442695
    %v1688 = vpow.pop %v1687
    %v1689 = vmul.f32 %v1579, 1.442695
    %v1690 = vpow.pop %v1689
    %v1691 = vmul.f32 %v1580, 1.442695
    %v1692 = vpow.pop %v1691
    %v1693 = vmul.f32 %v1581, 1.442695
    %v1694 = vpow.pop %v1693
    %v1695 = vmul.f32 %v1582, 1.442695
    %v1696 = vpow.pop %v1695
    %v1697 = vmul.f32 %v1583, 1.442695
    %v1698 = vpow.pop %v1697
    %v1699 = vmul.f32 %v1584, 1.442695
    %v1700 = vpow.pop %v1699
    %v1701 = vmul.f32 %v1585, 1.442695
    %v1702 = vpow.pop %v1701
    %v1703 = vmul.f32 %v1586, 1.442695
    %v1704 = vpow.pop %v1703
    %v1705 = vmul.f32 %v1587, 1.442695
    %v1706 = vpow.pop %v1705
    %v1707 = vmul.f32 %v1588, 1.442695
    %v1708 = vpow.pop %v1707
    %v1709 = vmul.f32 %v1589, 1.442695
    %v1710 = vpow.pop %v1709
    %v1711 = vmul.f32 %v1590, 1.442695
    %v1712 = vpow.pop %v1711
    %v1713 = vmul.f32 %v1591, 1.442695
    %v1714 = vpow.pop %v1713
    %v1715 = vmul.f32 %v1592, 1.442695
    %v1716 = vpow.pop %v1715
    %v1717 = vmul.f32 %v1593, 1.442695
    %v1718 = vpow.pop %v1717
    %v1719 = vmul.f32 %v1594, 1.442695
    %v1720 = vpow.pop %v1719
    %v1721 = vmul.f32 %v1595, 1.442695
    %v1722 = vpow.pop %v1721
    %v1723 = vmul.f32 %v1596, 1.442695
    %v1724 = vpow.pop %v1723
    %v1725 = vadd.f32 %v1598, %v1600
    %1726 = vadd.xlane.f32.xlu0 %v1725
    %v1727 = vpop.xlane.xlu0 %1726
    %v1728 = vadd.f32 %v1602, %v1604
    %1729 = vadd.xlane.f32.xlu0 %v1728
    %v1730 = vpop.xlane.xlu0 %1729
    %v1731 = vadd.f32 %v1606, %v1608
    %1732 = vadd.xlane.f32.xlu0 %v1731
    %v1733 = vpop.xlane.xlu0 %1732
    %v1734 = vadd.f32 %v1610, %v1612
    %1735 = vadd.xlane.f32.xlu0 %v1734
    %v1736 = vpop.xlane.xlu0 %1735
    %v1737 = vadd.f32 %v1614, %v1616
    %1738 = vadd.xlane.f32.xlu0 %v1737
    %v1739 = vpop.xlane.xlu0 %1738
    %v1740 = vadd.f32 %v1618, %v1620
    %1741 = vadd.xlane.f32.xlu0 %v1740
    %v1742 = vpop.xlane.xlu0 %1741
    %v1743 = vadd.f32 %v1622, %v1624
    %1744 = vadd.xlane.f32.xlu0 %v1743
    %v1745 = vpop.xlane.xlu0 %1744
    %v1746 = vadd.f32 %v1626, %v1628
    %1747 = vadd.xlane.f32.xlu0 %v1746
    %v1748 = vpop.xlane.xlu0 %1747
    %v1749 = vadd.f32 %v1630, %v1632
    %1750 = vadd.xlane.f32.xlu0 %v1749
    %v1751 = vpop.xlane.xlu0 %1750
    %v1752 = vadd.f32 %v1634, %v1636
    %1753 = vadd.xlane.f32.xlu0 %v1752
    %v1754 = vpop.xlane.xlu0 %1753
    %v1755 = vadd.f32 %v1638, %v1640
    %1756 = vadd.xlane.f32.xlu0 %v1755
    %v1757 = vpop.xlane.xlu0 %1756
    %v1758 = vadd.f32 %v1642, %v1644
    %1759 = vadd.xlane.f32.xlu0 %v1758
    %v1760 = vpop.xlane.xlu0 %1759
    %v1761 = vadd.f32 %v1646, %v1648
    %1762 = vadd.xlane.f32.xlu0 %v1761
    %v1763 = vpop.xlane.xlu0 %1762
    %v1764 = vadd.f32 %v1650, %v1652
    %1765 = vadd.xlane.f32.xlu0 %v1764
    %v1766 = vpop.xlane.xlu0 %1765
    %v1767 = vadd.f32 %v1654, %v1656
    %1768 = vadd.xlane.f32.xlu0 %v1767
    %v1769 = vpop.xlane.xlu0 %1768
    %v1770 = vadd.f32 %v1658, %v1660
    %1771 = vadd.xlane.f32.xlu0 %v1770
    %v1772 = vpop.xlane.xlu0 %1771
    %v1773 = vadd.f32 %v1662, %v1664
    %1774 = vadd.xlane.f32.xlu0 %v1773
    %v1775 = vpop.xlane.xlu0 %1774
    %v1776 = vadd.f32 %v1666, %v1668
    %1777 = vadd.xlane.f32.xlu0 %v1776
    %v1778 = vpop.xlane.xlu0 %1777
    %v1779 = vadd.f32 %v1670, %v1672
    %1780 = vadd.xlane.f32.xlu0 %v1779
    %v1781 = vpop.xlane.xlu0 %1780
    %v1782 = vadd.f32 %v1674, %v1676
    %1783 = vadd.xlane.f32.xlu0 %v1782
    %v1784 = vpop.xlane.xlu0 %1783
    %v1785 = vadd.f32 %v1678, %v1680
    %1786 = vadd.xlane.f32.xlu0 %v1785
    %v1787 = vpop.xlane.xlu0 %1786
    %v1788 = vadd.f32 %v1682, %v1684
    %1789 = vadd.xlane.f32.xlu0 %v1788
    %v1790 = vpop.xlane.xlu0 %1789
    %v1791 = vadd.f32 %v1686, %v1688
    %1792 = vadd.xlane.f32.xlu0 %v1791
    %v1793 = vpop.xlane.xlu0 %1792
    %v1794 = vadd.f32 %v1690, %v1692
    %1795 = vadd.xlane.f32.xlu0 %v1794
    %v1796 = vpop.xlane.xlu0 %1795
    %v1797 = vadd.f32 %v1694, %v1696
    %1798 = vadd.xlane.f32.xlu0 %v1797
    %v1799 = vpop.xlane.xlu0 %1798
    %v1800 = vadd.f32 %v1698, %v1700
    %1801 = vadd.xlane.f32.xlu0 %v1800
    %v1802 = vpop.xlane.xlu0 %1801
    %v1803 = vadd.f32 %v1702, %v1704
    %1804 = vadd.xlane.f32.xlu0 %v1803
    %v1805 = vpop.xlane.xlu0 %1804
    %v1806 = vadd.f32 %v1706, %v1708
    %1807 = vadd.xlane.f32.xlu0 %v1806
    %v1808 = vpop.xlane.xlu0 %1807
    %v1809 = vadd.f32 %v1710, %v1712
    %1810 = vadd.xlane.f32.xlu0 %v1809
    %v1811 = vpop.xlane.xlu0 %1810
    %v1812 = vadd.f32 %v1714, %v1716
    %1813 = vadd.xlane.f32.xlu0 %v1812
    %v1814 = vpop.xlane.xlu0 %1813
    %v1815 = vadd.f32 %v1718, %v1720
    %1816 = vadd.xlane.f32.xlu0 %v1815
    %v1817 = vpop.xlane.xlu0 %1816
    %v1818 = vadd.f32 %v1722, %v1724
    %1819 = vadd.xlane.f32.xlu0 %v1818
    %v1820 = vpop.xlane.xlu0 %1819
    %v1821 = vpack.c.bf16 %v1602, %v1598
    %v1822 = vpack.c.bf16 %v1604, %v1600
    %v1823 = vpack.c.bf16 %v1610, %v1606
    %v1824 = vpack.c.bf16 %v1612, %v1608
    %v1825 = vpack.c.bf16 %v1618, %v1614
    %v1826 = vpack.c.bf16 %v1620, %v1616
    %v1827 = vpack.c.bf16 %v1626, %v1622
    %v1828 = vpack.c.bf16 %v1628, %v1624
    %v1829 = vpack.c.bf16 %v1634, %v1630
    %v1830 = vpack.c.bf16 %v1636, %v1632
    %v1831 = vpack.c.bf16 %v1642, %v1638
    %v1832 = vpack.c.bf16 %v1644, %v1640
    %v1833 = vpack.c.bf16 %v1650, %v1646
    %v1834 = vpack.c.bf16 %v1652, %v1648
    %v1835 = vpack.c.bf16 %v1658, %v1654
    %v1836 = vpack.c.bf16 %v1660, %v1656
    %v1837 = vpack.c.bf16 %v1666, %v1662
    %v1838 = vpack.c.bf16 %v1668, %v1664
    %v1839 = vpack.c.bf16 %v1674, %v1670
    %v1840 = vpack.c.bf16 %v1676, %v1672
    %v1841 = vpack.c.bf16 %v1682, %v1678
    %v1842 = vpack.c.bf16 %v1684, %v1680
    %v1843 = vpack.c.bf16 %v1690, %v1686
    %v1844 = vpack.c.bf16 %v1692, %v1688
    %v1845 = vpack.c.bf16 %v1698, %v1694
    %v1846 = vpack.c.bf16 %v1700, %v1696
    %v1847 = vpack.c.bf16 %v1706, %v1702
    %v1848 = vpack.c.bf16 %v1708, %v1704
    %v1849 = vpack.c.bf16 %v1714, %v1710
    %v1850 = vpack.c.bf16 %v1716, %v1712
    %v1851 = vpack.c.bf16 %v1722, %v1718
    %v1852 = vpack.c.bf16 %v1724, %v1720
    %v1853 = vpack.c.bf16 %v1086, %v1084
    %v1854 = vpack.c.bf16 %v1091, %v1089
    %v1855 = vpack.c.bf16 %v1096, %v1094
    %v1856 = vpack.c.bf16 %v1101, %v1099
    %v1857 = vpack.c.bf16 %v1106, %v1104
    %v1858 = vpack.c.bf16 %v1111, %v1109
    %v1859 = vpack.c.bf16 %v1116, %v1114
    %v1860 = vpack.c.bf16 %v1121, %v1119
    %v1861 = vpack.c.bf16 %v1126, %v1124
    %v1862 = vpack.c.bf16 %v1131, %v1129
    %v1863 = vpack.c.bf16 %v1136, %v1134
    %v1864 = vpack.c.bf16 %v1141, %v1139
    %v1865 = vpack.c.bf16 %v1146, %v1144
    %v1866 = vpack.c.bf16 %v1151, %v1149
    %v1867 = vpack.c.bf16 %v1156, %v1154
    %v1868 = vpack.c.bf16 %v1161, %v1159
    %1869 = vmatpush.bf16.msra.mxu0 %v1860
    %1870 = vmatpush.bf16.msra.mxu0 %v1859
    %1871 = vmatpush.bf16.msra.mxu0 %v1858
    %1872 = vmatpush.bf16.msra.mxu0 %v1857
    %1873 = vmatpush.bf16.msra.mxu0 %v1856
    %1874 = vmatpush.bf16.msra.mxu0 %v1855
    %1875 = vmatpush.bf16.msra.mxu0 %v1854
    %1876 = vmatpush.bf16.msra.mxu0 %v1853
    %1877 = vmatmul.bf16.gmra.mxu0 %v1821
    %v1878 = vpop.f32.mrf.mxu0
    %v1879 = vadd.f32 0.0, %v1878
    %v1880 = vpop.f32.mrf.mxu0
    %v1881 = vadd.f32 0.0, %v1880
    %1882 = vmatmul.bf16.gmra.mxu0 %v1823
    %v1883 = vpop.f32.mrf.mxu0
    %v1884 = vadd.f32 0.0, %v1883
    %v1885 = vpop.f32.mrf.mxu0
    %v1886 = vadd.f32 0.0, %v1885
    %1887 = vmatmul.bf16.gmra.mxu0 %v1825
    %v1888 = vpop.f32.mrf.mxu0
    %v1889 = vadd.f32 0.0, %v1888
    %v1890 = vpop.f32.mrf.mxu0
    %v1891 = vadd.f32 0.0, %v1890
    %1892 = vmatmul.bf16.gmra.mxu0 %v1827
    %v1893 = vpop.f32.mrf.mxu0
    %v1894 = vadd.f32 0.0, %v1893
    %v1895 = vpop.f32.mrf.mxu0
    %v1896 = vadd.f32 0.0, %v1895
    %1897 = vmatmul.bf16.gmra.mxu0 %v1829
    %v1898 = vpop.f32.mrf.mxu0
    %v1899 = vadd.f32 0.0, %v1898
    %v1900 = vpop.f32.mrf.mxu0
    %v1901 = vadd.f32 0.0, %v1900
    %1902 = vmatmul.bf16.gmra.mxu0 %v1831
    %v1903 = vpop.f32.mrf.mxu0
    %v1904 = vadd.f32 0.0, %v1903
    %v1905 = vpop.f32.mrf.mxu0
    %v1906 = vadd.f32 0.0, %v1905
    %1907 = vmatmul.bf16.gmra.mxu0 %v1833
    %v1908 = vpop.f32.mrf.mxu0
    %v1909 = vadd.f32 0.0, %v1908
    %v1910 = vpop.f32.mrf.mxu0
    %v1911 = vadd.f32 0.0, %v1910
    %1912 = vmatmul.bf16.gmra.mxu0 %v1835
    %v1913 = vpop.f32.mrf.mxu0
    %v1914 = vadd.f32 0.0, %v1913
    %v1915 = vpop.f32.mrf.mxu0
    %v1916 = vadd.f32 0.0, %v1915
    %1917 = vmatmul.bf16.gmra.mxu0 %v1837
    %v1918 = vpop.f32.mrf.mxu0
    %v1919 = vadd.f32 0.0, %v1918
    %v1920 = vpop.f32.mrf.mxu0
    %v1921 = vadd.f32 0.0, %v1920
    %1922 = vmatmul.bf16.gmra.mxu0 %v1839
    %v1923 = vpop.f32.mrf.mxu0
    %v1924 = vadd.f32 0.0, %v1923
    %v1925 = vpop.f32.mrf.mxu0
    %v1926 = vadd.f32 0.0, %v1925
    %1927 = vmatmul.bf16.gmra.mxu0 %v1841
    %v1928 = vpop.f32.mrf.mxu0
    %v1929 = vadd.f32 0.0, %v1928
    %v1930 = vpop.f32.mrf.mxu0
    %v1931 = vadd.f32 0.0, %v1930
    %1932 = vmatmul.bf16.gmra.mxu0 %v1843
    %v1933 = vpop.f32.mrf.mxu0
    %v1934 = vadd.f32 0.0, %v1933
    %v1935 = vpop.f32.mrf.mxu0
    %v1936 = vadd.f32 0.0, %v1935
    %1937 = vmatmul.bf16.gmra.mxu0 %v1845
    %v1938 = vpop.f32.mrf.mxu0
    %v1939 = vadd.f32 0.0, %v1938
    %v1940 = vpop.f32.mrf.mxu0
    %v1941 = vadd.f32 0.0, %v1940
    %1942 = vmatmul.bf16.gmra.mxu0 %v1847
    %v1943 = vpop.f32.mrf.mxu0
    %v1944 = vadd.f32 0.0, %v1943
    %v1945 = vpop.f32.mrf.mxu0
    %v1946 = vadd.f32 0.0, %v1945
    %1947 = vmatmul.bf16.gmra.mxu0 %v1849
    %v1948 = vpop.f32.mrf.mxu0
    %v1949 = vadd.f32 0.0, %v1948
    %v1950 = vpop.f32.mrf.mxu0
    %v1951 = vadd.f32 0.0, %v1950
    %1952 = vmatmul.bf16.gmra.mxu0 %v1851
    %v1953 = vpop.f32.mrf.mxu0
    %v1954 = vadd.f32 0.0, %v1953
    %v1955 = vpop.f32.mrf.mxu0
    %v1956 = vadd.f32 0.0, %v1955
    %1957 = vdwg.mxu0
    %1958 = vmatpush.bf16.msra.mxu0 %v1868
    %1959 = vmatpush.bf16.msra.mxu0 %v1867
    %1960 = vmatpush.bf16.msra.mxu0 %v1866
    %1961 = vmatpush.bf16.msra.mxu0 %v1865
    %1962 = vmatpush.bf16.msra.mxu0 %v1864
    %1963 = vmatpush.bf16.msra.mxu0 %v1863
    %1964 = vmatpush.bf16.msra.mxu0 %v1862
    %1965 = vmatpush.bf16.msra.mxu0 %v1861
    %1966 = vmatmul.bf16.gmra.mxu0 %v1822
    %v1967 = vpop.f32.mrf.mxu0
    %v1968 = vadd.f32 %v1879, %v1967
    %v1969 = vpop.f32.mrf.mxu0
    %v1970 = vadd.f32 %v1881, %v1969
    %1971 = vmatmul.bf16.gmra.mxu0 %v1824
    %v1972 = vpop.f32.mrf.mxu0
    %v1973 = vadd.f32 %v1884, %v1972
    %v1974 = vpop.f32.mrf.mxu0
    %v1975 = vadd.f32 %v1886, %v1974
    %1976 = vmatmul.bf16.gmra.mxu0 %v1826
    %v1977 = vpop.f32.mrf.mxu0
    %v1978 = vadd.f32 %v1889, %v1977
    %v1979 = vpop.f32.mrf.mxu0
    %v1980 = vadd.f32 %v1891, %v1979
    %1981 = vmatmul.bf16.gmra.mxu0 %v1828
    %v1982 = vpop.f32.mrf.mxu0
    %v1983 = vadd.f32 %v1894, %v1982
    %v1984 = vpop.f32.mrf.mxu0
    %v1985 = vadd.f32 %v1896, %v1984
    %1986 = vmatmul.bf16.gmra.mxu0 %v1830
    %v1987 = vpop.f32.mrf.mxu0
    %v1988 = vadd.f32 %v1899, %v1987
    %v1989 = vpop.f32.mrf.mxu0
    %v1990 = vadd.f32 %v1901, %v1989
    %1991 = vmatmul.bf16.gmra.mxu0 %v1832
    %v1992 = vpop.f32.mrf.mxu0
    %v1993 = vadd.f32 %v1904, %v1992
    %v1994 = vpop.f32.mrf.mxu0
    %v1995 = vadd.f32 %v1906, %v1994
    %1996 = vmatmul.bf16.gmra.mxu0 %v1834
    %v1997 = vpop.f32.mrf.mxu0
    %v1998 = vadd.f32 %v1909, %v1997
    %v1999 = vpop.f32.mrf.mxu0
    %v2000 = vadd.f32 %v1911, %v1999
    %2001 = vmatmul.bf16.gmra.mxu0 %v1836
    %v2002 = vpop.f32.mrf.mxu0
    %v2003 = vadd.f32 %v1914, %v2002
    %v2004 = vpop.f32.mrf.mxu0
    %v2005 = vadd.f32 %v1916, %v2004
    %2006 = vmatmul.bf16.gmra.mxu0 %v1838
    %v2007 = vpop.f32.mrf.mxu0
    %v2008 = vadd.f32 %v1919, %v2007
    %v2009 = vpop.f32.mrf.mxu0
    %v2010 = vadd.f32 %v1921, %v2009
    %2011 = vmatmul.bf16.gmra.mxu0 %v1840
    %v2012 = vpop.f32.mrf.mxu0
    %v2013 = vadd.f32 %v1924, %v2012
    %v2014 = vpop.f32.mrf.mxu0
    %v2015 = vadd.f32 %v1926, %v2014
    %2016 = vmatmul.bf16.gmra.mxu0 %v1842
    %v2017 = vpop.f32.mrf.mxu0
    %v2018 = vadd.f32 %v1929, %v2017
    %v2019 = vpop.f32.mrf.mxu0
    %v2020 = vadd.f32 %v1931, %v2019
    %2021 = vmatmul.bf16.gmra.mxu0 %v1844
    %v2022 = vpop.f32.mrf.mxu0
    %v2023 = vadd.f32 %v1934, %v2022
    %v2024 = vpop.f32.mrf.mxu0
    %v2025 = vadd.f32 %v1936, %v2024
    %2026 = vmatmul.bf16.gmra.mxu0 %v1846
    %v2027 = vpop.f32.mrf.mxu0
    %v2028 = vadd.f32 %v1939, %v2027
    %v2029 = vpop.f32.mrf.mxu0
    %v2030 = vadd.f32 %v1941, %v2029
    %2031 = vmatmul.bf16.gmra.mxu0 %v1848
    %v2032 = vpop.f32.mrf.mxu0
    %v2033 = vadd.f32 %v1944, %v2032
    %v2034 = vpop.f32.mrf.mxu0
    %v2035 = vadd.f32 %v1946, %v2034
    %2036 = vmatmul.bf16.gmra.mxu0 %v1850
    %v2037 = vpop.f32.mrf.mxu0
    %v2038 = vadd.f32 %v1949, %v2037
    %v2039 = vpop.f32.mrf.mxu0
    %v2040 = vadd.f32 %v1951, %v2039
    %2041 = vmatmul.bf16.gmra.mxu0 %v1852
    %v2042 = vpop.f32.mrf.mxu0
    %v2043 = vadd.f32 %v1954, %v2042
    %v2044 = vpop.f32.mrf.mxu0
    %v2045 = vadd.f32 %v1956, %v2044
    %2046 = vdwg.mxu0
    %v2047 = vrcp.pop %v1727
    %v2048 = vrcp.pop %v1730
    %v2049 = vrcp.pop %v1733
    %v2050 = vrcp.pop %v1736
    %v2051 = vrcp.pop %v1739
    %v2052 = vrcp.pop %v1742
    %v2053 = vrcp.pop %v1745
    %v2054 = vrcp.pop %v1748
    %v2055 = vrcp.pop %v1751
    %v2056 = vrcp.pop %v1754
    %v2057 = vrcp.pop %v1757
    %v2058 = vrcp.pop %v1760
    %v2059 = vrcp.pop %v1763
    %v2060 = vrcp.pop %v1766
    %v2061 = vrcp.pop %v1769
    %v2062 = vrcp.pop %v1772
    %v2063 = vrcp.pop %v1775
    %v2064 = vrcp.pop %v1778
    %v2065 = vrcp.pop %v1781
    %v2066 = vrcp.pop %v1784
    %v2067 = vrcp.pop %v1787
    %v2068 = vrcp.pop %v1790
    %v2069 = vrcp.pop %v1793
    %v2070 = vrcp.pop %v1796
    %v2071 = vrcp.pop %v1799
    %v2072 = vrcp.pop %v1802
    %v2073 = vrcp.pop %v1805
    %v2074 = vrcp.pop %v1808
    %v2075 = vrcp.pop %v1811
    %v2076 = vrcp.pop %v1814
    %v2077 = vrcp.pop %v1817
    %v2078 = vrcp.pop %v1820
    %v2079 = vmul.f32 %v1968, %v2047
    %v2080 = vmul.f32 %v1970, %v2048
    %v2081 = vmul.f32 %v1973, %v2049
    %v2082 = vmul.f32 %v1975, %v2050
    %v2083 = vmul.f32 %v1978, %v2051
    %v2084 = vmul.f32 %v1980, %v2052
    %v2085 = vmul.f32 %v1983, %v2053
    %v2086 = vmul.f32 %v1985, %v2054
    %v2087 = vmul.f32 %v1988, %v2055
    %v2088 = vmul.f32 %v1990, %v2056
    %v2089 = vmul.f32 %v1993, %v2057
    %v2090 = vmul.f32 %v1995, %v2058
    %v2091 = vmul.f32 %v1998, %v2059
    %v2092 = vmul.f32 %v2000, %v2060
    %v2093 = vmul.f32 %v2003, %v2061
    %v2094 = vmul.f32 %v2005, %v2062
    %v2095 = vmul.f32 %v2008, %v2063
    %v2096 = vmul.f32 %v2010, %v2064
    %v2097 = vmul.f32 %v2013, %v2065
    %v2098 = vmul.f32 %v2015, %v2066
    %v2099 = vmul.f32 %v2018, %v2067
    %v2100 = vmul.f32 %v2020, %v2068
    %v2101 = vmul.f32 %v2023, %v2069
    %v2102 = vmul.f32 %v2025, %v2070
    %v2103 = vmul.f32 %v2028, %v2071
    %v2104 = vmul.f32 %v2030, %v2072
    %v2105 = vmul.f32 %v2033, %v2073
    %v2106 = vmul.f32 %v2035, %v2074
    %v2107 = vmul.f32 %v2038, %v2075
    %v2108 = vmul.f32 %v2040, %v2076
    %v2109 = vmul.f32 %v2043, %v2077
    %v2110 = vmul.f32 %v2045, %v2078
    %v2111 = vpack.c.bf16 %v2080, %v2079
    %v2112 = vpack.c.bf16 %v2082, %v2081
    %v2113 = vpack.c.bf16 %v2084, %v2083
    %v2114 = vpack.c.bf16 %v2086, %v2085
    %v2115 = vpack.c.bf16 %v2088, %v2087
    %v2116 = vpack.c.bf16 %v2090, %v2089
    %v2117 = vpack.c.bf16 %v2092, %v2091
    %v2118 = vpack.c.bf16 %v2094, %v2093
    %v2119 = vpack.c.bf16 %v2096, %v2095
    %v2120 = vpack.c.bf16 %v2098, %v2097
    %v2121 = vpack.c.bf16 %v2100, %v2099
    %v2122 = vpack.c.bf16 %v2102, %v2101
    %v2123 = vpack.c.bf16 %v2104, %v2103
    %v2124 = vpack.c.bf16 %v2106, %v2105
    %v2125 = vpack.c.bf16 %v2108, %v2107
    %v2126 = vpack.c.bf16 %v2110, %v2109
    %v2127 = vld [vmem:[%s3] sm:$0xf]
    %v2128 = vld [vmem:[%s3 + $0x4] sm:$0xf]
    %v2129 = vld [vmem:[%s3 + $0x8] sm:$0xf]
    %v2130 = vld [vmem:[%s3 + $0xc] sm:$0xf]
    %v2131 = vld [vmem:[%s3 + $0x10] sm:$0xf]
    %v2132 = vld [vmem:[%s3 + $0x14] sm:$0xf]
    %v2133 = vld [vmem:[%s3 + $0x18] sm:$0xf]
    %v2134 = vld [vmem:[%s3 + $0x1c] sm:$0xf]
    %v2135 = vld [vmem:[%s3 + $0x20] sm:$0xf]
    %v2136 = vld [vmem:[%s3 + $0x24] sm:$0xf]
    %v2137 = vld [vmem:[%s3 + $0x28] sm:$0xf]
    %v2138 = vld [vmem:[%s3 + $0x2c] sm:$0xf]
    %v2139 = vld [vmem:[%s3 + $0x30] sm:$0xf]
    %v2140 = vld [vmem:[%s3 + $0x34] sm:$0xf]
    %v2141 = vld [vmem:[%s3 + $0x38] sm:$0xf]
    %v2142 = vld [vmem:[%s3 + $0x3c] sm:$0xf]
    %v2143 = vld [vmem:[%s4] sm:$0x1]
    %v2145 = vperm.slane %v2143, 0
    %v2163 = vunpack.c.l.b16 %v2127
    %v2164 = vunpack.c.l.b16 %v2128
    %v2165 = vunpack.c.l.b16 %v2129
    %v2166 = vunpack.c.l.b16 %v2130
    %v2167 = vunpack.c.l.b16 %v2131
    %v2168 = vunpack.c.l.b16 %v2132
    %v2169 = vunpack.c.l.b16 %v2133
    %v2170 = vunpack.c.l.b16 %v2134
    %v2171 = vunpack.c.l.b16 %v2135
    %v2172 = vunpack.c.l.b16 %v2136
    %v2173 = vunpack.c.l.b16 %v2137
    %v2174 = vunpack.c.l.b16 %v2138
    %v2175 = vunpack.c.l.b16 %v2139
    %v2176 = vunpack.c.l.b16 %v2140
    %v2177 = vunpack.c.l.b16 %v2141
    %v2178 = vunpack.c.l.b16 %v2142
    %v2179 = vpack.c.b16 %v2164, %v2163
    %v2180 = vpack.c.b16 %v2166, %v2165
    %v2181 = vpack.c.b16 %v2168, %v2167
    %v2182 = vpack.c.b16 %v2170, %v2169
    %v2183 = vpack.c.b16 %v2172, %v2171
    %v2184 = vpack.c.b16 %v2174, %v2173
    %v2185 = vpack.c.b16 %v2176, %v2175
    %v2186 = vpack.c.b16 %v2178, %v2177
    %2195 = vmatpush.bf16.msra.mxu0 %v2186
    %2196 = vmatpush.bf16.msra.mxu0 %v2185
    %2197 = vmatpush.bf16.msra.mxu0 %v2184
    %2198 = vmatpush.bf16.msra.mxu0 %v2183
    %2199 = vmatpush.bf16.msra.mxu0 %v2182
    %2200 = vmatpush.bf16.msra.mxu0 %v2181
    %2201 = vmatpush.bf16.msra.mxu0 %v2180
    %2202 = vmatpush.bf16.msra.mxu0 %v2179
    %2203 = vmatmul.bf16.gmra.mxu0 %v2111
    %v2204 = vpop.f32.mrf.mxu0
    %v2205 = vadd.f32 %v2145, %v2204
    %v2206 = vpop.f32.mrf.mxu0
    %v2207 = vadd.f32 %v2145, %v2206
    %2208 = vmatmul.bf16.gmra.mxu0 %v2112
    %v2209 = vpop.f32.mrf.mxu0
    %v2210 = vadd.f32 %v2145, %v2209
    %v2211 = vpop.f32.mrf.mxu0
    %v2212 = vadd.f32 %v2145, %v2211
    %2213 = vmatmul.bf16.gmra.mxu0 %v2113
    %v2214 = vpop.f32.mrf.mxu0
    %v2215 = vadd.f32 %v2145, %v2214
    %v2216 = vpop.f32.mrf.mxu0
    %v2217 = vadd.f32 %v2145, %v2216
    %2218 = vmatmul.bf16.gmra.mxu0 %v2114
    %v2219 = vpop.f32.mrf.mxu0
    %v2220 = vadd.f32 %v2145, %v2219
    %v2221 = vpop.f32.mrf.mxu0
    %v2222 = vadd.f32 %v2145, %v2221
    %2223 = vmatmul.bf16.gmra.mxu0 %v2115
    %v2224 = vpop.f32.mrf.mxu0
    %v2225 = vadd.f32 %v2145, %v2224
    %v2226 = vpop.f32.mrf.mxu0
    %v2227 = vadd.f32 %v2145, %v2226
    %2228 = vmatmul.bf16.gmra.mxu0 %v2116
    %v2229 = vpop.f32.mrf.mxu0
    %v2230 = vadd.f32 %v2145, %v2229
    %v2231 = vpop.f32.mrf.mxu0
    %v2232 = vadd.f32 %v2145, %v2231
    %2233 = vmatmul.bf16.gmra.mxu0 %v2117
    %v2234 = vpop.f32.mrf.mxu0
    %v2235 = vadd.f32 %v2145, %v2234
    %v2236 = vpop.f32.mrf.mxu0
    %v2237 = vadd.f32 %v2145, %v2236
    %2238 = vmatmul.bf16.gmra.mxu0 %v2118
    %v2239 = vpop.f32.mrf.mxu0
    %v2240 = vadd.f32 %v2145, %v2239
    %v2241 = vpop.f32.mrf.mxu0
    %v2242 = vadd.f32 %v2145, %v2241
    %2243 = vmatmul.bf16.gmra.mxu0 %v2119
    %v2244 = vpop.f32.mrf.mxu0
    %v2245 = vadd.f32 %v2145, %v2244
    %v2246 = vpop.f32.mrf.mxu0
    %v2247 = vadd.f32 %v2145, %v2246
    %2248 = vmatmul.bf16.gmra.mxu0 %v2120
    %v2249 = vpop.f32.mrf.mxu0
    %v2250 = vadd.f32 %v2145, %v2249
    %v2251 = vpop.f32.mrf.mxu0
    %v2252 = vadd.f32 %v2145, %v2251
    %2253 = vmatmul.bf16.gmra.mxu0 %v2121
    %v2254 = vpop.f32.mrf.mxu0
    %v2255 = vadd.f32 %v2145, %v2254
    %v2256 = vpop.f32.mrf.mxu0
    %v2257 = vadd.f32 %v2145, %v2256
    %2258 = vmatmul.bf16.gmra.mxu0 %v2122
    %v2259 = vpop.f32.mrf.mxu0
    %v2260 = vadd.f32 %v2145, %v2259
    %v2261 = vpop.f32.mrf.mxu0
    %v2262 = vadd.f32 %v2145, %v2261
    %2263 = vmatmul.bf16.gmra.mxu0 %v2123
    %v2264 = vpop.f32.mrf.mxu0
    %v2265 = vadd.f32 %v2145, %v2264
    %v2266 = vpop.f32.mrf.mxu0
    %v2267 = vadd.f32 %v2145, %v2266
    %2268 = vmatmul.bf16.gmra.mxu0 %v2124
    %v2269 = vpop.f32.mrf.mxu0
    %v2270 = vadd.f32 %v2145, %v2269
    %v2271 = vpop.f32.mrf.mxu0
    %v2272 = vadd.f32 %v2145, %v2271
    %2273 = vmatmul.bf16.gmra.mxu0 %v2125
    %v2274 = vpop.f32.mrf.mxu0
    %v2275 = vadd.f32 %v2145, %v2274
    %v2276 = vpop.f32.mrf.mxu0
    %v2277 = vadd.f32 %v2145, %v2276
    %2278 = vmatmul.bf16.gmra.mxu0 %v2126
    %v2279 = vpop.f32.mrf.mxu0
    %v2280 = vadd.f32 %v2145, %v2279
    %v2281 = vpop.f32.mrf.mxu0
    %v2282 = vadd.f32 %v2145, %v2281
    %2283 = vdwg.mxu0
    %2284 = vst.msk [vmem:[%s6] sm:$0xff] %vm72, %v2205
    %2285 = vst.msk [vmem:[%s6 + $0x8] sm:$0xff] %vm72, %v2207
    %2286 = vst.msk [vmem:[%s6 + $0x10] sm:$0xff] %vm72, %v2210
    %2287 = vst.msk [vmem:[%s6 + $0x18] sm:$0xff] %vm72, %v2212
    %2288 = vst.msk [vmem:[%s6 + $0x20] sm:$0xff] %vm72, %v2215
    %2289 = vst.msk [vmem:[%s6 + $0x28] sm:$0xff] %vm72, %v2217
    %2290 = vst.msk [vmem:[%s6 + $0x30] sm:$0xff] %vm72, %v2220
    %2291 = vst.msk [vmem:[%s6 + $0x38] sm:$0xff] %vm72, %v2222
    %2292 = vst.msk [vmem:[%s6 + $0x40] sm:$0xff] %vm72, %v2225
    %2293 = vst.msk [vmem:[%s6 + $0x48] sm:$0xff] %vm72, %v2227
    %2294 = vst.msk [vmem:[%s6 + $0x50] sm:$0xff] %vm72, %v2230
    %2295 = vst.msk [vmem:[%s6 + $0x58] sm:$0xff] %vm72, %v2232
    %2296 = vst.msk [vmem:[%s6 + $0x60] sm:$0xff] %vm72, %v2235
    %2297 = vst.msk [vmem:[%s6 + $0x68] sm:$0xff] %vm72, %v2237
    %2298 = vst.msk [vmem:[%s6 + $0x70] sm:$0xff] %vm72, %v2240
    %2299 = vst.msk [vmem:[%s6 + $0x78] sm:$0xff] %vm72, %v2242
    %2300 = vst.msk [vmem:[%s6 + $0x80] sm:$0xff] %vm72, %v2245
    %2301 = vst.msk [vmem:[%s6 + $0x88] sm:$0xff] %vm72, %v2247
    %2302 = vst.msk [vmem:[%s6 + $0x90] sm:$0xff] %vm72, %v2250
    %2303 = vst.msk [vmem:[%s6 + $0x98] sm:$0xff] %vm72, %v2252
    %2304 = vst.msk [vmem:[%s6 + $0xa0] sm:$0xff] %vm72, %v2255
    %2305 = vst.msk [vmem:[%s6 + $0xa8] sm:$0xff] %vm72, %v2257
    %2306 = vst.msk [vmem:[%s6 + $0xb0] sm:$0xff] %vm72, %v2260
    %2307 = vst.msk [vmem:[%s6 + $0xb8] sm:$0xff] %vm72, %v2262
    %2308 = vst.msk [vmem:[%s6 + $0xc0] sm:$0xff] %vm72, %v2265
    %2309 = vst.msk [vmem:[%s6 + $0xc8] sm:$0xff] %vm72, %v2267
    %2310 = vst.msk [vmem:[%s6 + $0xd0] sm:$0xff] %vm72, %v2270
    %2311 = vst.msk [vmem:[%s6 + $0xd8] sm:$0xff] %vm72, %v2272
    %2312 = vst.msk [vmem:[%s6 + $0xe0] sm:$0xff] %vm72, %v2275
    %2313 = vst.msk [vmem:[%s6 + $0xe8] sm:$0xff] %vm72, %v2277
    %2314 = vst.msk [vmem:[%s6 + $0xf0] sm:$0xff] %vm72, %v2280
    %2315 = vst.msk [vmem:[%s6 + $0xf8] sm:$0xff] %vm72, %v2282
    // Predicated region
    $region30: #{tpu_custom_call.1} parent=1 // pred_check
      _
    $region31: #{tpu_custom_call.1} parent=1 // pred_check_branch
      %2317 = sbr.rel (0) target = $region33
    $region32: #{tpu_custom_call.1} parent=1 // pred_region
      _
    $region33: #{tpu_custom_call.1} parent=1 // pred_fallthru
      _
    // Predicated region
    $region34: #{tpu_custom_call.1} parent=1 // pred_check
      _
    $region35: #{tpu_custom_call.1} parent=1 // pred_check_branch
      %2319 = sbr.rel (0) target = $region37
    $region36: #{tpu_custom_call.1} parent=1 // pred_region
      _
    $region37: #{tpu_custom_call.1} parent=1 // pred_fallthru
      _
    %2320 = vsyncpa [#allocation3], 1

</llo_original>
